<compile_context>
chip_gen: v6e
topology: v6e:2x2x1
jax: 0.10.0
libtpu: 0.0.40
codegen_flags: <defaults>
</compile_context>

<pallas_src>
import functools

import jax
import jax.numpy as jnp
from jax.experimental import pallas as pl
from jax.experimental.pallas import tpu as pltpu


def _round_up(n, m):
    return ((n + m - 1) // m) * m


def _simple_fc_kernel(x_ref, w1_ref, b1_ref, w2_ref, b2_ref, w3_ref, b3_ref,
                      o_ref):
    """Fused 3x (Linear + ReLU). dropout(p=0.0) is the identity."""
    h = jnp.dot(x_ref[...], w1_ref[...], preferred_element_type=jnp.float32)
    h = jnp.maximum(h + b1_ref[...], 0.0)

    h = jnp.dot(h.astype(w2_ref.dtype), w2_ref[...],
                preferred_element_type=jnp.float32)
    h = jnp.maximum(h + b2_ref[...], 0.0)

    h = jnp.dot(h.astype(w3_ref.dtype), w3_ref[...],
                preferred_element_type=jnp.float32)
    h = jnp.maximum(h + b3_ref[...], 0.0)

    o_ref[...] = h.astype(o_ref.dtype)


@functools.partial(jax.jit, static_argnames=("tile_m", "compute_dtype"))
def simple_fc_forward(x, params, *, tile_m=256, compute_dtype=jnp.bfloat16):
    """x: (B, 784) float32 -> (B, 128) float32."""
    w1, b1, w2, b2, w3, b3 = params
    B, K = x.shape
    N_out = w3.shape[1]

    # Lane-align the contraction dim: 784 -> 896 (zero pad x cols + W1 rows).
    K_pad = _round_up(K, 128)
    if K_pad != K:
        x = jnp.pad(x, ((0, 0), (0, K_pad - K)))
        w1 = jnp.pad(w1, ((0, K_pad - K), (0, 0)))

    # Batch tile: big batches stream in tile_m-row chunks; small batches pad
    # up to a multiple of 8 sublanes and run as a single grid step.
    tm = tile_m if B >= tile_m else _round_up(max(B, 8), 8)
    B_pad = _round_up(B, tm)
    if B_pad != B:
        x = jnp.pad(x, ((0, B_pad - B), (0, 0)))

    # bf16 on the MXU; accumulation stays f32 inside the kernel.
    x = x.astype(compute_dtype)
    w1, w2, w3 = (w.astype(compute_dtype) for w in (w1, w2, w3))

    grid = (B_pad // tm,)

    # Weights / biases: full-array blocks whose block index never changes, so
    # they are DMA'd once and stay resident in VMEM across all grid steps.
    resident = lambda shape: pl.BlockSpec(shape, lambda i: (0,) * len(shape))

    n1, n2 = w1.shape[1], w2.shape[1]
    flops = 2 * B_pad * (K_pad * n1 + n1 * n2 + n2 * N_out)
    bytes_accessed = int(
        x.size * jnp.dtype(compute_dtype).itemsize
        + sum(a.size * jnp.dtype(a.dtype).itemsize
              for a in (w1, b1, w2, b2, w3, b3))
        + B_pad * N_out * 4)

    out = pl.pallas_call(
        _simple_fc_kernel,
        out_shape=jax.ShapeDtypeStruct((B_pad, N_out), jnp.float32),
        grid=grid,
        in_specs=[
            pl.BlockSpec((tm, K_pad), lambda i: (i, 0)),     # x: streamed tile
            resident(w1.shape), resident(b1.shape),
            resident(w2.shape), resident(b2.shape),
            resident(w3.shape), resident(b3.shape),
        ],
        out_specs=pl.BlockSpec((tm, N_out), lambda i: (i, 0)),
        compiler_params=pltpu.CompilerParams(
            dimension_semantics=("parallel",),
            vmem_limit_bytes=48 << 20),
        cost_estimate=pl.CostEstimate(
            flops=flops, transcendentals=0, bytes_accessed=bytes_accessed),
    )(x, w1, b1, w2, b2, w3, b3)

    return out[:B]


def init_params(key):
    """Deterministic init mimicking torch.nn.Linear (uniform ±1/sqrt(fan_in)).

    Weights are stored (in_features, out_features); biases are (1, out) so
    they stay 2-D inside the kernel. Parameters kept in f32 (master copy);
    the wrapper casts matmul operands to bf16.
    """
    dims = [(28 * 28, 512), (512, 256), (256, 128)]
    params = []
    for (fan_in, fan_out) in dims:
        key, kw, kb = jax.random.split(key, 3)
        bound = 1.0 / jnp.sqrt(jnp.float32(fan_in))
        w = jax.random.uniform(kw, (fan_in, fan_out), jnp.float32,
                               minval=-bound, maxval=bound)
        b = jax.random.uniform(kb, (1, fan_out), jnp.float32,
                               minval=-bound, maxval=bound)
        params += [w, b]
    # linear4 (128 -> 10) is defined in the PyTorch module but unused in
    # forward(); initialize it for parity but do not use it.
    key, kw4, kb4 = jax.random.split(key, 3)
    bound4 = 1.0 / jnp.sqrt(jnp.float32(128))
    _w4 = jax.random.uniform(kw4, (128, 10), jnp.float32, -bound4, bound4)
    _b4 = jax.random.uniform(kb4, (1, 10), jnp.float32, -bound4, bound4)
    return tuple(params)


def reference_forward(x, params, compute_dtype=jnp.bfloat16):
    """Pure-JAX reference matching the kernel's numeric recipe
    (bf16 matmul operands, f32 accumulation, f32 bias/ReLU)."""
    w1, b1, w2, b2, w3, b3 = params
    h = x
    for w, b in ((w1, b1), (w2, b2), (w3, b3)):
        h = jnp.dot(h.astype(compute_dtype), w.astype(compute_dtype),
                    preferred_element_type=jnp.float32)
        h = jnp.maximum(h + b, 0.0)
    return h


if __name__ == "__main__":
    key = jax.random.PRNGKey(0)
    key, kx = jax.random.split(key)

    input_size = 28 * 28
    params = init_params(key)

    # Small-shape check (B=2, the module's nominal usage): single grid step.
    x_small = jax.random.normal(kx, (2, input_size), jnp.float32)
    out_small = jax.block_until_ready(simple_fc_forward(x_small, params))
    ref_small = reference_forward(x_small, params)
    assert out_small.shape == (2, 128), out_small.shape
    assert jnp.allclose(out_small, ref_small, atol=5e-3, rtol=5e-3), \
        "mismatch vs reference (B=2)"

    # Larger batch exercising the tiled, multi-program pipelined path.
    key, kx2 = jax.random.split(key)
    x_big = jax.random.normal(kx2, (512, input_size), jnp.float32)
    out_big = jax.block_until_ready(simple_fc_forward(x_big, params))
    ref_big = reference_forward(x_big, params)
    assert out_big.shape == (512, 128), out_big.shape
    assert jnp.allclose(out_big, ref_big, atol=5e-3, rtol=5e-3), \
        "mismatch vs reference (B=512)"

    print("KERNEL_OK")
</pallas_src>

<mosaic_0001>
module attributes {stable_mosaic.version = 11 : i64} {
  func.func @_simple_fc_kernel(%arg0: i32, %arg1: memref<8x896xbf16, #tpu.memory_space<vmem>>, %arg2: memref<896x512xbf16, #tpu.memory_space<vmem>>, %arg3: memref<1x512xf32, #tpu.memory_space<vmem>>, %arg4: memref<512x256xbf16, #tpu.memory_space<vmem>>, %arg5: memref<1x256xf32, #tpu.memory_space<vmem>>, %arg6: memref<256x128xbf16, #tpu.memory_space<vmem>>, %arg7: memref<1x128xf32, #tpu.memory_space<vmem>>, %arg8: memref<8x128xf32, #tpu.memory_space<vmem>>) attributes {dimension_semantics = [#tpu.dimension_semantics<parallel>], iteration_bounds = array<i64: 1>, scalar_prefetch = 0 : i64, scratch_operands = 0 : i64, tpu.core_type = #tpu.core_type<tc>, window_params = [{transform_indices = @transform_0, window_bounds = array<i64: 8, 896>}, {pipeline_mode = #tpu.pipeline_mode<synchronous>, transform_indices = @transform_1, window_bounds = array<i64: 896, 512>}, {pipeline_mode = #tpu.pipeline_mode<synchronous>, transform_indices = @transform_2, window_bounds = array<i64: 1, 512>}, {pipeline_mode = #tpu.pipeline_mode<synchronous>, transform_indices = @transform_3, window_bounds = array<i64: 512, 256>}, {pipeline_mode = #tpu.pipeline_mode<synchronous>, transform_indices = @transform_4, window_bounds = array<i64: 1, 256>}, {pipeline_mode = #tpu.pipeline_mode<synchronous>, transform_indices = @transform_5, window_bounds = array<i64: 256, 128>}, {pipeline_mode = #tpu.pipeline_mode<synchronous>, transform_indices = @transform_6, window_bounds = array<i64: 1, 128>}, {transform_indices = @transform_7, window_bounds = array<i64: 8, 128>}]} {
    %c0 = arith.constant 0 : index
    %c0_0 = arith.constant 0 : index
    %0 = vector.load %arg1[%c0, %c0_0] : memref<8x896xbf16, #tpu.memory_space<vmem>>, vector<8x896xbf16>
    %c0_1 = arith.constant 0 : index
    %c0_2 = arith.constant 0 : index
    %1 = vector.load %arg2[%c0_1, %c0_2] : memref<896x512xbf16, #tpu.memory_space<vmem>>, vector<896x512xbf16>
    %cst = arith.constant dense<0.000000e+00> : vector<8x512xf32>
    %2 = tpu.matmul %0, %1, %cst {dimension_numbers = #tpu.dot_dimension_numbers<[1], [0], [0], [1], [0, 0, 1, 1], [], []>} : vector<8x896xbf16>, vector<896x512xbf16>, vector<8x512xf32> -> vector<8x512xf32>
    %c0_3 = arith.constant 0 : index
    %c0_4 = arith.constant 0 : index
    %3 = vector.load %arg3[%c0_3, %c0_4] : memref<1x512xf32, #tpu.memory_space<vmem>>, vector<1x512xf32>
    %4 = vector.broadcast %3 : vector<1x512xf32> to vector<8x512xf32>
    %5 = arith.addf %2, %4 : vector<8x512xf32>
    %cst_5 = arith.constant 0.000000e+00 : f32
    %6 = vector.broadcast %cst_5 : f32 to vector<8x512xf32>
    %7 = arith.maximumf %5, %6 : vector<8x512xf32>
    %8 = arith.truncf %7 : vector<8x512xf32> to vector<8x512xbf16>
    %c0_6 = arith.constant 0 : index
    %c0_7 = arith.constant 0 : index
    %9 = vector.load %arg4[%c0_6, %c0_7] : memref<512x256xbf16, #tpu.memory_space<vmem>>, vector<512x256xbf16>
    %cst_8 = arith.constant dense<0.000000e+00> : vector<8x256xf32>
    %10 = tpu.matmul %8, %9, %cst_8 {dimension_numbers = #tpu.dot_dimension_numbers<[1], [0], [0], [1], [0, 0, 1, 1], [], []>} : vector<8x512xbf16>, vector<512x256xbf16>, vector<8x256xf32> -> vector<8x256xf32>
    %c0_9 = arith.constant 0 : index
    %c0_10 = arith.constant 0 : index
    %11 = vector.load %arg5[%c0_9, %c0_10] : memref<1x256xf32, #tpu.memory_space<vmem>>, vector<1x256xf32>
    %12 = vector.broadcast %11 : vector<1x256xf32> to vector<8x256xf32>
    %13 = arith.addf %10, %12 : vector<8x256xf32>
    %cst_11 = arith.constant 0.000000e+00 : f32
    %14 = vector.broadcast %cst_11 : f32 to vector<8x256xf32>
    %15 = arith.maximumf %13, %14 : vector<8x256xf32>
    %16 = arith.truncf %15 : vector<8x256xf32> to vector<8x256xbf16>
    %c0_12 = arith.constant 0 : index
    %c0_13 = arith.constant 0 : index
    %17 = vector.load %arg6[%c0_12, %c0_13] : memref<256x128xbf16, #tpu.memory_space<vmem>>, vector<256x128xbf16>
    %cst_14 = arith.constant dense<0.000000e+00> : vector<8x128xf32>
    %18 = tpu.matmul %16, %17, %cst_14 {dimension_numbers = #tpu.dot_dimension_numbers<[1], [0], [0], [1], [0, 0, 1, 1], [], []>} : vector<8x256xbf16>, vector<256x128xbf16>, vector<8x128xf32> -> vector<8x128xf32>
    %c0_15 = arith.constant 0 : index
    %c0_16 = arith.constant 0 : index
    %19 = vector.load %arg7[%c0_15, %c0_16] : memref<1x128xf32, #tpu.memory_space<vmem>>, vector<1x128xf32>
    %20 = vector.broadcast %19 : vector<1x128xf32> to vector<8x128xf32>
    %21 = arith.addf %18, %20 : vector<8x128xf32>
    %cst_17 = arith.constant 0.000000e+00 : f32
    %22 = vector.broadcast %cst_17 : f32 to vector<8x128xf32>
    %23 = arith.maximumf %21, %22 : vector<8x128xf32>
    %c0_18 = arith.constant 0 : index
    %c0_19 = arith.constant 0 : index
    %24 = vector.load %arg8[%c0_18, %c0_19] : memref<8x128xf32, #tpu.memory_space<vmem>>, vector<8x128xf32>
    tpu.vector_store %arg8[%c0_18, %c0_19], %23 {strides = array<i32>} : memref<8x128xf32, #tpu.memory_space<vmem>>, vector<8x128xf32>,
    return
  }
  func.func @transform_0(%arg0: i32) -> (i32, i32) {
    %c0_i32 = arith.constant 0 : i32
    %c0_i32_0 = arith.constant 0 : i32
    return %arg0, %c0_i32 : i32, i32
  }
  func.func @transform_1(%arg0: i32) -> (i32, i32) {
    %c0_i32 = arith.constant 0 : i32
    %c0_i32_0 = arith.constant 0 : i32
    %c0_i32_1 = arith.constant 0 : i32
    return %c0_i32, %c0_i32_0 : i32, i32
  }
  func.func @transform_2(%arg0: i32) -> (i32, i32) {
    %c0_i32 = arith.constant 0 : i32
    %c0_i32_0 = arith.constant 0 : i32
    %c0_i32_1 = arith.constant 0 : i32
    return %c0_i32, %c0_i32_0 : i32, i32
  }
  func.func @transform_3(%arg0: i32) -> (i32, i32) {
    %c0_i32 = arith.constant 0 : i32
    %c0_i32_0 = arith.constant 0 : i32
    %c0_i32_1 = arith.constant 0 : i32
    return %c0_i32, %c0_i32_0 : i32, i32
  }
  func.func @transform_4(%arg0: i32) -> (i32, i32) {
    %c0_i32 = arith.constant 0 : i32
    %c0_i32_0 = arith.constant 0 : i32
    %c0_i32_1 = arith.constant 0 : i32
    return %c0_i32, %c0_i32_0 : i32, i32
  }
  func.func @transform_5(%arg0: i32) -> (i32, i32) {
    %c0_i32 = arith.constant 0 : i32
    %c0_i32_0 = arith.constant 0 : i32
    %c0_i32_1 = arith.constant 0 : i32
    return %c0_i32, %c0_i32_0 : i32, i32
  }
  func.func @transform_6(%arg0: i32) -> (i32, i32) {
    %c0_i32 = arith.constant 0 : i32
    %c0_i32_0 = arith.constant 0 : i32
    %c0_i32_1 = arith.constant 0 : i32
    return %c0_i32, %c0_i32_0 : i32, i32
  }
  func.func @transform_7(%arg0: i32) -> (i32, i32) {
    %c0_i32 = arith.constant 0 : i32
    %c0_i32_0 = arith.constant 0 : i32
    return %arg0, %c0_i32 : i32, i32
  }
}

</mosaic_0001>

<llo_original>
// kernel: simple_fc_forward.1
$region0: #{simple_fc_forward.1}
  #allocation0 [shape = 'u32[]', space=smem, size = 0x4, offset = 0x4, fixed_abs, tag = 'smem constant byte address 0x4 - core index']
  #allocation1 [shape = 'u32[144,128]{1,0:T(1,128)}', space=vmem, size = 0x12000, scoped, tag = 'internal scratch']
  %s0 = inlined_call_operand.vmem [shape: bf16[8,896], index: 0, kind: input, shape index: {}]
  %s1 = inlined_call_operand.vmem [shape: bf16[896,512], index: 1, kind: input, shape index: {}]
  %s2 = inlined_call_operand.vmem [shape: f32[1,512], index: 2, kind: input, shape index: {}]
  %s3 = inlined_call_operand.vmem [shape: bf16[512,256], index: 3, kind: input, shape index: {}]
  %s4 = inlined_call_operand.vmem [shape: f32[1,256], index: 4, kind: input, shape index: {}]
  %s5 = inlined_call_operand.vmem [shape: bf16[256,128], index: 5, kind: input, shape index: {}]
  %s6 = inlined_call_operand.vmem [shape: f32[1,128], index: 6, kind: input, shape index: {}]
  %s7 = inlined_call_operand.vmem [shape: f32[8,128], index: 7, kind: output, shape index: {}]
  %s8 = sld [smem:[#allocation0]]
  $region38: #{simple_fc_forward.1} parent=0
    _
  %s10 = ssub.s32 1, %s8
  %s11 = scalar_select 0, %s10, %s8
  // Predicated region
  $region2: #{simple_fc_forward.1} parent=0 // pred_check
    _
  $region3: #{simple_fc_forward.1} parent=0 // pred_check_branch
    %13 = sbr.rel (0) target = $region5
  $region4: #{simple_fc_forward.1} parent=0 // pred_region
    _
  $region5: #{simple_fc_forward.1} parent=0 // pred_fallthru
    _
  // Predicated region
  $region6: #{simple_fc_forward.1} parent=0 // pred_check
    _
  $region7: #{simple_fc_forward.1} parent=0 // pred_check_branch
    %15 = sbr.rel (0) target = $region9
  $region8: #{simple_fc_forward.1} parent=0 // pred_region
    _
  $region9: #{simple_fc_forward.1} parent=0 // pred_fallthru
    _
  // Predicated region
  $region10: #{simple_fc_forward.1} parent=0 // pred_check
    _
  $region11: #{simple_fc_forward.1} parent=0 // pred_check_branch
    %17 = sbr.rel (0) target = $region13
  $region12: #{simple_fc_forward.1} parent=0 // pred_region
    _
  $region13: #{simple_fc_forward.1} parent=0 // pred_fallthru
    _
  // Predicated region
  $region14: #{simple_fc_forward.1} parent=0 // pred_check
    _
  $region15: #{simple_fc_forward.1} parent=0 // pred_check_branch
    %19 = sbr.rel (0) target = $region17
  $region16: #{simple_fc_forward.1} parent=0 // pred_region
    _
  $region17: #{simple_fc_forward.1} parent=0 // pred_fallthru
    _
  // Predicated region
  $region18: #{simple_fc_forward.1} parent=0 // pred_check
    _
  $region19: #{simple_fc_forward.1} parent=0 // pred_check_branch
    %21 = sbr.rel (0) target = $region21
  $region20: #{simple_fc_forward.1} parent=0 // pred_region
    _
  $region21: #{simple_fc_forward.1} parent=0 // pred_fallthru
    _
  // Predicated region
  $region22: #{simple_fc_forward.1} parent=0 // pred_check
    _
  $region23: #{simple_fc_forward.1} parent=0 // pred_check_branch
    %23 = sbr.rel (0) target = $region25
  $region24: #{simple_fc_forward.1} parent=0 // pred_region
    _
  $region25: #{simple_fc_forward.1} parent=0 // pred_fallthru
    _
  // Predicated region
  $region26: #{simple_fc_forward.1} parent=0 // pred_check
    _
  $region27: #{simple_fc_forward.1} parent=0 // pred_check_branch
    %25 = sbr.rel (0) target = $region29
  $region28: #{simple_fc_forward.1} parent=0 // pred_region
    _
  $region29: #{simple_fc_forward.1} parent=0 // pred_fallthru
    _
  %v27 = vld [vmem:[%s0] sm:$0xff]
  %v28 = vld [vmem:[%s0 + $0x8] sm:$0xff]
  %v29 = vld [vmem:[%s0 + $0x10] sm:$0xff]
  %v30 = vld [vmem:[%s0 + $0x18] sm:$0xf]
  %v31 = vld [vmem:[%s1] sm:$0xff]
  %v32 = vld [vmem:[%s1 + $0x8] sm:$0xff]
  %v33 = vld [vmem:[%s1 + $0x10] sm:$0xff]
  %v34 = vld [vmem:[%s1 + $0x18] sm:$0xff]
  %v35 = vld [vmem:[%s1 + $0x20] sm:$0xff]
  %v36 = vld [vmem:[%s1 + $0x28] sm:$0xff]
  %v37 = vld [vmem:[%s1 + $0x30] sm:$0xff]
  %v38 = vld [vmem:[%s1 + $0x38] sm:$0xff]
  %v39 = vld [vmem:[%s1 + $0x40] sm:$0xff]
  %v40 = vld [vmem:[%s1 + $0x48] sm:$0xff]
  %v41 = vld [vmem:[%s1 + $0x50] sm:$0xff]
  %v42 = vld [vmem:[%s1 + $0x58] sm:$0xff]
  %v43 = vld [vmem:[%s1 + $0x60] sm:$0xff]
  %v44 = vld [vmem:[%s1 + $0x68] sm:$0xff]
  %v45 = vld [vmem:[%s1 + $0x70] sm:$0xff]
  %v46 = vld [vmem:[%s1 + $0x78] sm:$0xff]
  %v47 = vld [vmem:[%s1 + $0x80] sm:$0xff]
  %v48 = vld [vmem:[%s1 + $0x88] sm:$0xff]
  %v49 = vld [vmem:[%s1 + $0x90] sm:$0xff]
  %v50 = vld [vmem:[%s1 + $0x98] sm:$0xff]
  %v51 = vld [vmem:[%s1 + $0xa0] sm:$0xff]
  %v52 = vld [vmem:[%s1 + $0xa8] sm:$0xff]
  %v53 = vld [vmem:[%s1 + $0xb0] sm:$0xff]
  %v54 = vld [vmem:[%s1 + $0xb8] sm:$0xff]
  %v55 = vld [vmem:[%s1 + $0xc0] sm:$0xff]
  %v56 = vld [vmem:[%s1 + $0xc8] sm:$0xff]
  %v57 = vld [vmem:[%s1 + $0xd0] sm:$0xff]
  %v58 = vld [vmem:[%s1 + $0xd8] sm:$0xff]
  %v59 = vld [vmem:[%s1 + $0xe0] sm:$0xff]
  %v60 = vld [vmem:[%s1 + $0xe8] sm:$0xff]
  %v61 = vld [vmem:[%s1 + $0xf0] sm:$0xff]
  %v62 = vld [vmem:[%s1 + $0xf8] sm:$0xff]
  %v63 = vld [vmem:[%s1 + $0x100] sm:$0xff]
  %v64 = vld [vmem:[%s1 + $0x108] sm:$0xff]
  %v65 = vld [vmem:[%s1 + $0x110] sm:$0xff]
  %v66 = vld [vmem:[%s1 + $0x118] sm:$0xff]
  %v67 = vld [vmem:[%s1 + $0x120] sm:$0xff]
  %v68 = vld [vmem:[%s1 + $0x128] sm:$0xff]
  %v69 = vld [vmem:[%s1 + $0x130] sm:$0xff]
  %v70 = vld [vmem:[%s1 + $0x138] sm:$0xff]
  %v71 = vld [vmem:[%s1 + $0x140] sm:$0xff]
  %v72 = vld [vmem:[%s1 + $0x148] sm:$0xff]
  %v73 = vld [vmem:[%s1 + $0x150] sm:$0xff]
  %v74 = vld [vmem:[%s1 + $0x158] sm:$0xff]
  %v75 = vld [vmem:[%s1 + $0x160] sm:$0xff]
  %v76 = vld [vmem:[%s1 + $0x168] sm:$0xff]
  %v77 = vld [vmem:[%s1 + $0x170] sm:$0xff]
  %v78 = vld [vmem:[%s1 + $0x178] sm:$0xff]
  %v79 = vld [vmem:[%s1 + $0x180] sm:$0xff]
  %v80 = vld [vmem:[%s1 + $0x188] sm:$0xff]
  %v81 = vld [vmem:[%s1 + $0x190] sm:$0xff]
  %v82 = vld [vmem:[%s1 + $0x198] sm:$0xff]
  %v83 = vld [vmem:[%s1 + $0x1a0] sm:$0xff]
  %v84 = vld [vmem:[%s1 + $0x1a8] sm:$0xff]
  %v85 = vld [vmem:[%s1 + $0x1b0] sm:$0xff]
  %v86 = vld [vmem:[%s1 + $0x1b8] sm:$0xff]
  %v87 = vld [vmem:[%s1 + $0x1c0] sm:$0xff]
  %v88 = vld [vmem:[%s1 + $0x1c8] sm:$0xff]
  %v89 = vld [vmem:[%s1 + $0x1d0] sm:$0xff]
  %v90 = vld [vmem:[%s1 + $0x1d8] sm:$0xff]
  %v91 = vld [vmem:[%s1 + $0x1e0] sm:$0xff]
  %v92 = vld [vmem:[%s1 + $0x1e8] sm:$0xff]
  %v93 = vld [vmem:[%s1 + $0x1f0] sm:$0xff]
  %v94 = vld [vmem:[%s1 + $0x1f8] sm:$0xff]
  %v95 = vld [vmem:[%s1 + $0x200] sm:$0xff]
  %v96 = vld [vmem:[%s1 + $0x208] sm:$0xff]
  %v97 = vld [vmem:[%s1 + $0x210] sm:$0xff]
  %v98 = vld [vmem:[%s1 + $0x218] sm:$0xff]
  %v99 = vld [vmem:[%s1 + $0x220] sm:$0xff]
  %v100 = vld [vmem:[%s1 + $0x228] sm:$0xff]
  %v101 = vld [vmem:[%s1 + $0x230] sm:$0xff]
  %v102 = vld [vmem:[%s1 + $0x238] sm:$0xff]
  %v103 = vld [vmem:[%s1 + $0x240] sm:$0xff]
  %v104 = vld [vmem:[%s1 + $0x248] sm:$0xff]
  %v105 = vld [vmem:[%s1 + $0x250] sm:$0xff]
  %v106 = vld [vmem:[%s1 + $0x258] sm:$0xff]
  %v107 = vld [vmem:[%s1 + $0x260] sm:$0xff]
  %v108 = vld [vmem:[%s1 + $0x268] sm:$0xff]
  %v109 = vld [vmem:[%s1 + $0x270] sm:$0xff]
  %v110 = vld [vmem:[%s1 + $0x278] sm:$0xff]
  %v111 = vld [vmem:[%s1 + $0x280] sm:$0xff]
  %v112 = vld [vmem:[%s1 + $0x288] sm:$0xff]
  %v113 = vld [vmem:[%s1 + $0x290] sm:$0xff]
  %v114 = vld [vmem:[%s1 + $0x298] sm:$0xff]
  %v115 = vld [vmem:[%s1 + $0x2a0] sm:$0xff]
  %v116 = vld [vmem:[%s1 + $0x2a8] sm:$0xff]
  %v117 = vld [vmem:[%s1 + $0x2b0] sm:$0xff]
  %v118 = vld [vmem:[%s1 + $0x2b8] sm:$0xff]
  %v119 = vld [vmem:[%s1 + $0x2c0] sm:$0xff]
  %v120 = vld [vmem:[%s1 + $0x2c8] sm:$0xff]
  %v121 = vld [vmem:[%s1 + $0x2d0] sm:$0xff]
  %v122 = vld [vmem:[%s1 + $0x2d8] sm:$0xff]
  %v123 = vld [vmem:[%s1 + $0x2e0] sm:$0xff]
  %v124 = vld [vmem:[%s1 + $0x2e8] sm:$0xff]
  %v125 = vld [vmem:[%s1 + $0x2f0] sm:$0xff]
  %v126 = vld [vmem:[%s1 + $0x2f8] sm:$0xff]
  %v127 = vld [vmem:[%s1 + $0x300] sm:$0xff]
  %v128 = vld [vmem:[%s1 + $0x308] sm:$0xff]
  %v129 = vld [vmem:[%s1 + $0x310] sm:$0xff]
  %v130 = vld [vmem:[%s1 + $0x318] sm:$0xff]
  %v131 = vld [vmem:[%s1 + $0x320] sm:$0xff]
  %v132 = vld [vmem:[%s1 + $0x328] sm:$0xff]
  %v133 = vld [vmem:[%s1 + $0x330] sm:$0xff]
  %v134 = vld [vmem:[%s1 + $0x338] sm:$0xff]
  %v135 = vld [vmem:[%s1 + $0x340] sm:$0xff]
  %v136 = vld [vmem:[%s1 + $0x348] sm:$0xff]
  %v137 = vld [vmem:[%s1 + $0x350] sm:$0xff]
  %v138 = vld [vmem:[%s1 + $0x358] sm:$0xff]
  %v139 = vld [vmem:[%s1 + $0x360] sm:$0xff]
  %v140 = vld [vmem:[%s1 + $0x368] sm:$0xff]
  %v141 = vld [vmem:[%s1 + $0x370] sm:$0xff]
  %v142 = vld [vmem:[%s1 + $0x378] sm:$0xff]
  %v143 = vld [vmem:[%s1 + $0x380] sm:$0xff]
  %v144 = vld [vmem:[%s1 + $0x388] sm:$0xff]
  %v145 = vld [vmem:[%s1 + $0x390] sm:$0xff]
  %v146 = vld [vmem:[%s1 + $0x398] sm:$0xff]
  %v147 = vld [vmem:[%s1 + $0x3a0] sm:$0xff]
  %v148 = vld [vmem:[%s1 + $0x3a8] sm:$0xff]
  %v149 = vld [vmem:[%s1 + $0x3b0] sm:$0xff]
  %v150 = vld [vmem:[%s1 + $0x3b8] sm:$0xff]
  %v151 = vld [vmem:[%s1 + $0x3c0] sm:$0xff]
  %v152 = vld [vmem:[%s1 + $0x3c8] sm:$0xff]
  %v153 = vld [vmem:[%s1 + $0x3d0] sm:$0xff]
  %v154 = vld [vmem:[%s1 + $0x3d8] sm:$0xff]
  %v155 = vld [vmem:[%s1 + $0x3e0] sm:$0xff]
  %v156 = vld [vmem:[%s1 + $0x3e8] sm:$0xff]
  %v157 = vld [vmem:[%s1 + $0x3f0] sm:$0xff]
  %v158 = vld [vmem:[%s1 + $0x3f8] sm:$0xff]
  %v159 = vld [vmem:[%s1 + $0x400] sm:$0xff]
  %v160 = vld [vmem:[%s1 + $0x408] sm:$0xff]
  %v161 = vld [vmem:[%s1 + $0x410] sm:$0xff]
  %v162 = vld [vmem:[%s1 + $0x418] sm:$0xff]
  %v163 = vld [vmem:[%s1 + $0x420] sm:$0xff]
  %v164 = vld [vmem:[%s1 + $0x428] sm:$0xff]
  %v165 = vld [vmem:[%s1 + $0x430] sm:$0xff]
  %v166 = vld [vmem:[%s1 + $0x438] sm:$0xff]
  %v167 = vld [vmem:[%s1 + $0x440] sm:$0xff]
  %v168 = vld [vmem:[%s1 + $0x448] sm:$0xff]
  %v169 = vld [vmem:[%s1 + $0x450] sm:$0xff]
  %v170 = vld [vmem:[%s1 + $0x458] sm:$0xff]
  %v171 = vld [vmem:[%s1 + $0x460] sm:$0xff]
  %v172 = vld [vmem:[%s1 + $0x468] sm:$0xff]
  %v173 = vld [vmem:[%s1 + $0x470] sm:$0xff]
  %v174 = vld [vmem:[%s1 + $0x478] sm:$0xff]
  %v175 = vld [vmem:[%s1 + $0x480] sm:$0xff]
  %v176 = vld [vmem:[%s1 + $0x488] sm:$0xff]
  %v177 = vld [vmem:[%s1 + $0x490] sm:$0xff]
  %v178 = vld [vmem:[%s1 + $0x498] sm:$0xff]
  %v179 = vld [vmem:[%s1 + $0x4a0] sm:$0xff]
  %v180 = vld [vmem:[%s1 + $0x4a8] sm:$0xff]
  %v181 = vld [vmem:[%s1 + $0x4b0] sm:$0xff]
  %v182 = vld [vmem:[%s1 + $0x4b8] sm:$0xff]
  %v183 = vld [vmem:[%s1 + $0x4c0] sm:$0xff]
  %v184 = vld [vmem:[%s1 + $0x4c8] sm:$0xff]
  %v185 = vld [vmem:[%s1 + $0x4d0] sm:$0xff]
  %v186 = vld [vmem:[%s1 + $0x4d8] sm:$0xff]
  %v187 = vld [vmem:[%s1 + $0x4e0] sm:$0xff]
  %v188 = vld [vmem:[%s1 + $0x4e8] sm:$0xff]
  %v189 = vld [vmem:[%s1 + $0x4f0] sm:$0xff]
  %v190 = vld [vmem:[%s1 + $0x4f8] sm:$0xff]
  %v191 = vld [vmem:[%s1 + $0x500] sm:$0xff]
  %v192 = vld [vmem:[%s1 + $0x508] sm:$0xff]
  %v193 = vld [vmem:[%s1 + $0x510] sm:$0xff]
  %v194 = vld [vmem:[%s1 + $0x518] sm:$0xff]
  %v195 = vld [vmem:[%s1 + $0x520] sm:$0xff]
  %v196 = vld [vmem:[%s1 + $0x528] sm:$0xff]
  %v197 = vld [vmem:[%s1 + $0x530] sm:$0xff]
  %v198 = vld [vmem:[%s1 + $0x538] sm:$0xff]
  %v199 = vld [vmem:[%s1 + $0x540] sm:$0xff]
  %v200 = vld [vmem:[%s1 + $0x548] sm:$0xff]
  %v201 = vld [vmem:[%s1 + $0x550] sm:$0xff]
  %v202 = vld [vmem:[%s1 + $0x558] sm:$0xff]
  %v203 = vld [vmem:[%s1 + $0x560] sm:$0xff]
  %v204 = vld [vmem:[%s1 + $0x568] sm:$0xff]
  %v205 = vld [vmem:[%s1 + $0x570] sm:$0xff]
  %v206 = vld [vmem:[%s1 + $0x578] sm:$0xff]
  %v207 = vld [vmem:[%s1 + $0x580] sm:$0xff]
  %v208 = vld [vmem:[%s1 + $0x588] sm:$0xff]
  %v209 = vld [vmem:[%s1 + $0x590] sm:$0xff]
  %v210 = vld [vmem:[%s1 + $0x598] sm:$0xff]
  %v211 = vld [vmem:[%s1 + $0x5a0] sm:$0xff]
  %v212 = vld [vmem:[%s1 + $0x5a8] sm:$0xff]
  %v213 = vld [vmem:[%s1 + $0x5b0] sm:$0xff]
  %v214 = vld [vmem:[%s1 + $0x5b8] sm:$0xff]
  %v215 = vld [vmem:[%s1 + $0x5c0] sm:$0xff]
  %v216 = vld [vmem:[%s1 + $0x5c8] sm:$0xff]
  %v217 = vld [vmem:[%s1 + $0x5d0] sm:$0xff]
  %v218 = vld [vmem:[%s1 + $0x5d8] sm:$0xff]
  %v219 = vld [vmem:[%s1 + $0x5e0] sm:$0xff]
  %v220 = vld [vmem:[%s1 + $0x5e8] sm:$0xff]
  %v221 = vld [vmem:[%s1 + $0x5f0] sm:$0xff]
  %v222 = vld [vmem:[%s1 + $0x5f8] sm:$0xff]
  %v223 = vld [vmem:[%s1 + $0x600] sm:$0xff]
  %v224 = vld [vmem:[%s1 + $0x608] sm:$0xff]
  %v225 = vld [vmem:[%s1 + $0x610] sm:$0xff]
  %v226 = vld [vmem:[%s1 + $0x618] sm:$0xff]
  %v227 = vld [vmem:[%s1 + $0x620] sm:$0xff]
  %v228 = vld [vmem:[%s1 + $0x628] sm:$0xff]
  %v229 = vld [vmem:[%s1 + $0x630] sm:$0xff]
  %v230 = vld [vmem:[%s1 + $0x638] sm:$0xff]
  %v231 = vld [vmem:[%s1 + $0x640] sm:$0xff]
  %v232 = vld [vmem:[%s1 + $0x648] sm:$0xff]
  %v233 = vld [vmem:[%s1 + $0x650] sm:$0xff]
  %v234 = vld [vmem:[%s1 + $0x658] sm:$0xff]
  %v235 = vld [vmem:[%s1 + $0x660] sm:$0xff]
  %v236 = vld [vmem:[%s1 + $0x668] sm:$0xff]
  %v237 = vld [vmem:[%s1 + $0x670] sm:$0xff]
  %v238 = vld [vmem:[%s1 + $0x678] sm:$0xff]
  %v239 = vld [vmem:[%s1 + $0x680] sm:$0xff]
  %v240 = vld [vmem:[%s1 + $0x688] sm:$0xff]
  %v241 = vld [vmem:[%s1 + $0x690] sm:$0xff]
  %v242 = vld [vmem:[%s1 + $0x698] sm:$0xff]
  %v243 = vld [vmem:[%s1 + $0x6a0] sm:$0xff]
  %v244 = vld [vmem:[%s1 + $0x6a8] sm:$0xff]
  %v245 = vld [vmem:[%s1 + $0x6b0] sm:$0xff]
  %v246 = vld [vmem:[%s1 + $0x6b8] sm:$0xff]
  %v247 = vld [vmem:[%s1 + $0x6c0] sm:$0xff]
  %v248 = vld [vmem:[%s1 + $0x6c8] sm:$0xff]
  %v249 = vld [vmem:[%s1 + $0x6d0] sm:$0xff]
  %v250 = vld [vmem:[%s1 + $0x6d8] sm:$0xff]
  %v251 = vld [vmem:[%s1 + $0x6e0] sm:$0xff]
  %v252 = vld [vmem:[%s1 + $0x6e8] sm:$0xff]
  %v253 = vld [vmem:[%s1 + $0x6f0] sm:$0xff]
  %v254 = vld [vmem:[%s1 + $0x6f8] sm:$0xff]
  %v255 = vld [vmem:[%s2] sm:$0xf]
  %v257 = vlaneseq
  %v258 = vshrl.u32 %v257, 7
  %v259 = vsub.s32 0, %v258
  %v260 = vrot.slane %v255, %v259
  %v261 = vlaneseq
  %v262 = vshrl.u32 %v261, 7
  %v263 = vsub.s32 1, %v262
  %v264 = vrot.slane %v255, %v263
  %v265 = vlaneseq
  %v266 = vshrl.u32 %v265, 7
  %v267 = vsub.s32 2, %v266
  %v268 = vrot.slane %v255, %v267
  %v269 = vlaneseq
  %v270 = vshrl.u32 %v269, 7
  %v271 = vsub.s32 3, %v270
  %v272 = vrot.slane %v255, %v271
  %v281 = vunpack.c.l.b16 %v27
  %v282 = vunpack.c.h.b16 %v27
  %v283 = vunpack.c.l.b16 %v28
  %v284 = vunpack.c.h.b16 %v28
  %v285 = vunpack.c.l.b16 %v29
  %v286 = vunpack.c.h.b16 %v29
  %v287 = vunpack.c.l.b16 %v30
  %v288 = vpack.c.b16 %v281, %v281
  %v289 = vpack.c.b16 %v282, %v282
  %v290 = vpack.c.b16 %v283, %v283
  %v291 = vpack.c.b16 %v284, %v284
  %v292 = vpack.c.b16 %v285, %v285
  %v293 = vpack.c.b16 %v286, %v286
  %v294 = vpack.c.b16 %v287, %v287
  %v526 = vunpack.c.l.b16 %v31
  %v527 = vunpack.c.h.b16 %v31
  %v528 = vunpack.c.l.b16 %v32
  %v529 = vunpack.c.h.b16 %v32
  %v530 = vunpack.c.l.b16 %v33
  %v531 = vunpack.c.h.b16 %v33
  %v532 = vunpack.c.l.b16 %v34
  %v533 = vunpack.c.h.b16 %v34
  %v534 = vunpack.c.l.b16 %v35
  %v535 = vunpack.c.h.b16 %v35
  %v536 = vunpack.c.l.b16 %v36
  %v537 = vunpack.c.h.b16 %v36
  %v538 = vunpack.c.l.b16 %v37
  %v539 = vunpack.c.h.b16 %v37
  %v540 = vunpack.c.l.b16 %v38
  %v541 = vunpack.c.h.b16 %v38
  %v542 = vunpack.c.l.b16 %v39
  %v543 = vunpack.c.h.b16 %v39
  %v544 = vunpack.c.l.b16 %v40
  %v545 = vunpack.c.h.b16 %v40
  %v546 = vunpack.c.l.b16 %v41
  %v547 = vunpack.c.h.b16 %v41
  %v548 = vunpack.c.l.b16 %v42
  %v549 = vunpack.c.h.b16 %v42
  %v550 = vunpack.c.l.b16 %v43
  %v551 = vunpack.c.h.b16 %v43
  %v552 = vunpack.c.l.b16 %v44
  %v553 = vunpack.c.h.b16 %v44
  %v554 = vunpack.c.l.b16 %v45
  %v555 = vunpack.c.h.b16 %v45
  %v556 = vunpack.c.l.b16 %v46
  %v557 = vunpack.c.h.b16 %v46
  %v558 = vunpack.c.l.b16 %v47
  %v559 = vunpack.c.h.b16 %v47
  %v560 = vunpack.c.l.b16 %v48
  %v561 = vunpack.c.h.b16 %v48
  %v562 = vunpack.c.l.b16 %v49
  %v563 = vunpack.c.h.b16 %v49
  %v564 = vunpack.c.l.b16 %v50
  %v565 = vunpack.c.h.b16 %v50
  %v566 = vunpack.c.l.b16 %v51
  %v567 = vunpack.c.h.b16 %v51
  %v568 = vunpack.c.l.b16 %v52
  %v569 = vunpack.c.h.b16 %v52
  %v570 = vunpack.c.l.b16 %v53
  %v571 = vunpack.c.h.b16 %v53
  %v572 = vunpack.c.l.b16 %v54
  %v573 = vunpack.c.h.b16 %v54
  %v574 = vunpack.c.l.b16 %v55
  %v575 = vunpack.c.h.b16 %v55
  %v576 = vunpack.c.l.b16 %v56
  %v577 = vunpack.c.h.b16 %v56
  %v578 = vunpack.c.l.b16 %v57
  %v579 = vunpack.c.h.b16 %v57
  %v580 = vunpack.c.l.b16 %v58
  %v581 = vunpack.c.h.b16 %v58
  %v582 = vunpack.c.l.b16 %v59
  %v583 = vunpack.c.h.b16 %v59
  %v584 = vunpack.c.l.b16 %v60
  %v585 = vunpack.c.h.b16 %v60
  %v586 = vunpack.c.l.b16 %v61
  %v587 = vunpack.c.h.b16 %v61
  %v588 = vunpack.c.l.b16 %v62
  %v589 = vunpack.c.h.b16 %v62
  %v590 = vunpack.c.l.b16 %v63
  %v591 = vunpack.c.h.b16 %v63
  %v592 = vunpack.c.l.b16 %v64
  %v593 = vunpack.c.h.b16 %v64
  %v594 = vunpack.c.l.b16 %v65
  %v595 = vunpack.c.h.b16 %v65
  %v596 = vunpack.c.l.b16 %v66
  %v597 = vunpack.c.h.b16 %v66
  %v598 = vunpack.c.l.b16 %v67
  %v599 = vunpack.c.h.b16 %v67
  %v600 = vunpack.c.l.b16 %v68
  %v601 = vunpack.c.h.b16 %v68
  %v602 = vunpack.c.l.b16 %v69
  %v603 = vunpack.c.h.b16 %v69
  %v604 = vunpack.c.l.b16 %v70
  %v605 = vunpack.c.h.b16 %v70
  %v606 = vunpack.c.l.b16 %v71
  %v607 = vunpack.c.h.b16 %v71
  %v608 = vunpack.c.l.b16 %v72
  %v609 = vunpack.c.h.b16 %v72
  %v610 = vunpack.c.l.b16 %v73
  %v611 = vunpack.c.h.b16 %v73
  %v612 = vunpack.c.l.b16 %v74
  %v613 = vunpack.c.h.b16 %v74
  %v614 = vunpack.c.l.b16 %v75
  %v615 = vunpack.c.h.b16 %v75
  %v616 = vunpack.c.l.b16 %v76
  %v617 = vunpack.c.h.b16 %v76
  %v618 = vunpack.c.l.b16 %v77
  %v619 = vunpack.c.h.b16 %v77
  %v620 = vunpack.c.l.b16 %v78
  %v621 = vunpack.c.h.b16 %v78
  %v622 = vunpack.c.l.b16 %v79
  %v623 = vunpack.c.h.b16 %v79
  %v624 = vunpack.c.l.b16 %v80
  %v625 = vunpack.c.h.b16 %v80
  %v626 = vunpack.c.l.b16 %v81
  %v627 = vunpack.c.h.b16 %v81
  %v628 = vunpack.c.l.b16 %v82
  %v629 = vunpack.c.h.b16 %v82
  %v630 = vunpack.c.l.b16 %v83
  %v631 = vunpack.c.h.b16 %v83
  %v632 = vunpack.c.l.b16 %v84
  %v633 = vunpack.c.h.b16 %v84
  %v634 = vunpack.c.l.b16 %v85
  %v635 = vunpack.c.h.b16 %v85
  %v636 = vunpack.c.l.b16 %v86
  %v637 = vunpack.c.h.b16 %v86
  %v638 = vunpack.c.l.b16 %v87
  %v639 = vunpack.c.h.b16 %v87
  %v640 = vunpack.c.l.b16 %v88
  %v641 = vunpack.c.h.b16 %v88
  %v642 = vunpack.c.l.b16 %v89
  %v643 = vunpack.c.h.b16 %v89
  %v644 = vunpack.c.l.b16 %v90
  %v645 = vunpack.c.h.b16 %v90
  %v646 = vunpack.c.l.b16 %v91
  %v647 = vunpack.c.h.b16 %v91
  %v648 = vunpack.c.l.b16 %v92
  %v649 = vunpack.c.h.b16 %v92
  %v650 = vunpack.c.l.b16 %v93
  %v651 = vunpack.c.h.b16 %v93
  %v652 = vunpack.c.l.b16 %v94
  %v653 = vunpack.c.h.b16 %v94
  %v654 = vunpack.c.l.b16 %v95
  %v655 = vunpack.c.h.b16 %v95
  %v656 = vunpack.c.l.b16 %v96
  %v657 = vunpack.c.h.b16 %v96
  %v658 = vunpack.c.l.b16 %v97
  %v659 = vunpack.c.h.b16 %v97
  %v660 = vunpack.c.l.b16 %v98
  %v661 = vunpack.c.h.b16 %v98
  %v662 = vunpack.c.l.b16 %v99
  %v663 = vunpack.c.h.b16 %v99
  %v664 = vunpack.c.l.b16 %v100
  %v665 = vunpack.c.h.b16 %v100
  %v666 = vunpack.c.l.b16 %v101
  %v667 = vunpack.c.h.b16 %v101
  %v668 = vunpack.c.l.b16 %v102
  %v669 = vunpack.c.h.b16 %v102
  %v670 = vunpack.c.l.b16 %v103
  %v671 = vunpack.c.h.b16 %v103
  %v672 = vunpack.c.l.b16 %v104
  %v673 = vunpack.c.h.b16 %v104
  %v674 = vunpack.c.l.b16 %v105
  %v675 = vunpack.c.h.b16 %v105
  %v676 = vunpack.c.l.b16 %v106
  %v677 = vunpack.c.h.b16 %v106
  %v678 = vunpack.c.l.b16 %v107
  %v679 = vunpack.c.h.b16 %v107
  %v680 = vunpack.c.l.b16 %v108
  %v681 = vunpack.c.h.b16 %v108
  %v682 = vunpack.c.l.b16 %v109
  %v683 = vunpack.c.h.b16 %v109
  %v684 = vunpack.c.l.b16 %v110
  %v685 = vunpack.c.h.b16 %v110
  %v686 = vunpack.c.l.b16 %v111
  %v687 = vunpack.c.h.b16 %v111
  %v688 = vunpack.c.l.b16 %v112
  %v689 = vunpack.c.h.b16 %v112
  %v690 = vunpack.c.l.b16 %v113
  %v691 = vunpack.c.h.b16 %v113
  %v692 = vunpack.c.l.b16 %v114
  %v693 = vunpack.c.h.b16 %v114
  %v694 = vunpack.c.l.b16 %v115
  %v695 = vunpack.c.h.b16 %v115
  %v696 = vunpack.c.l.b16 %v116
  %v697 = vunpack.c.h.b16 %v116
  %v698 = vunpack.c.l.b16 %v117
  %v699 = vunpack.c.h.b16 %v117
  %v700 = vunpack.c.l.b16 %v118
  %v701 = vunpack.c.h.b16 %v118
  %v702 = vunpack.c.l.b16 %v119
  %v703 = vunpack.c.h.b16 %v119
  %v704 = vunpack.c.l.b16 %v120
  %v705 = vunpack.c.h.b16 %v120
  %v706 = vunpack.c.l.b16 %v121
  %v707 = vunpack.c.h.b16 %v121
  %v708 = vunpack.c.l.b16 %v122
  %v709 = vunpack.c.h.b16 %v122
  %v710 = vunpack.c.l.b16 %v123
  %v711 = vunpack.c.h.b16 %v123
  %v712 = vunpack.c.l.b16 %v124
  %v713 = vunpack.c.h.b16 %v124
  %v714 = vunpack.c.l.b16 %v125
  %v715 = vunpack.c.h.b16 %v125
  %v716 = vunpack.c.l.b16 %v126
  %v717 = vunpack.c.h.b16 %v126
  %v718 = vunpack.c.l.b16 %v127
  %v719 = vunpack.c.h.b16 %v127
  %v720 = vunpack.c.l.b16 %v128
  %v721 = vunpack.c.h.b16 %v128
  %v722 = vunpack.c.l.b16 %v129
  %v723 = vunpack.c.h.b16 %v129
  %v724 = vunpack.c.l.b16 %v130
  %v725 = vunpack.c.h.b16 %v130
  %v726 = vunpack.c.l.b16 %v131
  %v727 = vunpack.c.h.b16 %v131
  %v728 = vunpack.c.l.b16 %v132
  %v729 = vunpack.c.h.b16 %v132
  %v730 = vunpack.c.l.b16 %v133
  %v731 = vunpack.c.h.b16 %v133
  %v732 = vunpack.c.l.b16 %v134
  %v733 = vunpack.c.h.b16 %v134
  %v734 = vunpack.c.l.b16 %v135
  %v735 = vunpack.c.h.b16 %v135
  %v736 = vunpack.c.l.b16 %v136
  %v737 = vunpack.c.h.b16 %v136
  %v738 = vunpack.c.l.b16 %v137
  %v739 = vunpack.c.h.b16 %v137
  %v740 = vunpack.c.l.b16 %v138
  %v741 = vunpack.c.h.b16 %v138
  %v742 = vunpack.c.l.b16 %v139
  %v743 = vunpack.c.h.b16 %v139
  %v744 = vunpack.c.l.b16 %v140
  %v745 = vunpack.c.h.b16 %v140
  %v746 = vunpack.c.l.b16 %v141
  %v747 = vunpack.c.h.b16 %v141
  %v748 = vunpack.c.l.b16 %v142
  %v749 = vunpack.c.h.b16 %v142
  %v750 = vunpack.c.l.b16 %v143
  %v751 = vunpack.c.h.b16 %v143
  %v752 = vunpack.c.l.b16 %v144
  %v753 = vunpack.c.h.b16 %v144
  %v754 = vunpack.c.l.b16 %v145
  %v755 = vunpack.c.h.b16 %v145
  %v756 = vunpack.c.l.b16 %v146
  %v757 = vunpack.c.h.b16 %v146
  %v758 = vunpack.c.l.b16 %v147
  %v759 = vunpack.c.h.b16 %v147
  %v760 = vunpack.c.l.b16 %v148
  %v761 = vunpack.c.h.b16 %v148
  %v762 = vunpack.c.l.b16 %v149
  %v763 = vunpack.c.h.b16 %v149
  %v764 = vunpack.c.l.b16 %v150
  %v765 = vunpack.c.h.b16 %v150
  %v766 = vunpack.c.l.b16 %v151
  %v767 = vunpack.c.h.b16 %v151
  %v768 = vunpack.c.l.b16 %v152
  %v769 = vunpack.c.h.b16 %v152
  %v770 = vunpack.c.l.b16 %v153
  %v771 = vunpack.c.h.b16 %v153
  %v772 = vunpack.c.l.b16 %v154
  %v773 = vunpack.c.h.b16 %v154
  %v774 = vunpack.c.l.b16 %v155
  %v775 = vunpack.c.h.b16 %v155
  %v776 = vunpack.c.l.b16 %v156
  %v777 = vunpack.c.h.b16 %v156
  %v778 = vunpack.c.l.b16 %v157
  %v779 = vunpack.c.h.b16 %v157
  %v780 = vunpack.c.l.b16 %v158
  %v781 = vunpack.c.h.b16 %v158
  %v782 = vunpack.c.l.b16 %v159
  %v783 = vunpack.c.h.b16 %v159
  %v784 = vunpack.c.l.b16 %v160
  %v785 = vunpack.c.h.b16 %v160
  %v786 = vunpack.c.l.b16 %v161
  %v787 = vunpack.c.h.b16 %v161
  %v788 = vunpack.c.l.b16 %v162
  %v789 = vunpack.c.h.b16 %v162
  %v790 = vunpack.c.l.b16 %v163
  %v791 = vunpack.c.h.b16 %v163
  %v792 = vunpack.c.l.b16 %v164
  %v793 = vunpack.c.h.b16 %v164
  %v794 = vunpack.c.l.b16 %v165
  %v795 = vunpack.c.h.b16 %v165
  %v796 = vunpack.c.l.b16 %v166
  %v797 = vunpack.c.h.b16 %v166
  %v798 = vunpack.c.l.b16 %v167
  %v799 = vunpack.c.h.b16 %v167
  %v800 = vunpack.c.l.b16 %v168
  %v801 = vunpack.c.h.b16 %v168
  %v802 = vunpack.c.l.b16 %v169
  %v803 = vunpack.c.h.b16 %v169
  %v804 = vunpack.c.l.b16 %v170
  %v805 = vunpack.c.h.b16 %v170
  %v806 = vunpack.c.l.b16 %v171
  %v807 = vunpack.c.h.b16 %v171
  %v808 = vunpack.c.l.b16 %v172
  %v809 = vunpack.c.h.b16 %v172
  %v810 = vunpack.c.l.b16 %v173
  %v811 = vunpack.c.h.b16 %v173
  %v812 = vunpack.c.l.b16 %v174
  %v813 = vunpack.c.h.b16 %v174
  %v814 = vunpack.c.l.b16 %v175
  %v815 = vunpack.c.h.b16 %v175
  %v816 = vunpack.c.l.b16 %v176
  %v817 = vunpack.c.h.b16 %v176
  %v818 = vunpack.c.l.b16 %v177
  %v819 = vunpack.c.h.b16 %v177
  %v820 = vunpack.c.l.b16 %v178
  %v821 = vunpack.c.h.b16 %v178
  %v822 = vunpack.c.l.b16 %v179
  %v823 = vunpack.c.h.b16 %v179
  %v824 = vunpack.c.l.b16 %v180
  %v825 = vunpack.c.h.b16 %v180
  %v826 = vunpack.c.l.b16 %v181
  %v827 = vunpack.c.h.b16 %v181
  %v828 = vunpack.c.l.b16 %v182
  %v829 = vunpack.c.h.b16 %v182
  %v830 = vunpack.c.l.b16 %v183
  %v831 = vunpack.c.h.b16 %v183
  %v832 = vunpack.c.l.b16 %v184
  %v833 = vunpack.c.h.b16 %v184
  %v834 = vunpack.c.l.b16 %v185
  %v835 = vunpack.c.h.b16 %v185
  %v836 = vunpack.c.l.b16 %v186
  %v837 = vunpack.c.h.b16 %v186
  %v838 = vunpack.c.l.b16 %v187
  %v839 = vunpack.c.h.b16 %v187
  %v840 = vunpack.c.l.b16 %v188
  %v841 = vunpack.c.h.b16 %v188
  %v842 = vunpack.c.l.b16 %v189
  %v843 = vunpack.c.h.b16 %v189
  %v844 = vunpack.c.l.b16 %v190
  %v845 = vunpack.c.h.b16 %v190
  %v846 = vunpack.c.l.b16 %v191
  %v847 = vunpack.c.h.b16 %v191
  %v848 = vunpack.c.l.b16 %v192
  %v849 = vunpack.c.h.b16 %v192
  %v850 = vunpack.c.l.b16 %v193
  %v851 = vunpack.c.h.b16 %v193
  %v852 = vunpack.c.l.b16 %v194
  %v853 = vunpack.c.h.b16 %v194
  %v854 = vunpack.c.l.b16 %v195
  %v855 = vunpack.c.h.b16 %v195
  %v856 = vunpack.c.l.b16 %v196
  %v857 = vunpack.c.h.b16 %v196
  %v858 = vunpack.c.l.b16 %v197
  %v859 = vunpack.c.h.b16 %v197
  %v860 = vunpack.c.l.b16 %v198
  %v861 = vunpack.c.h.b16 %v198
  %v862 = vunpack.c.l.b16 %v199
  %v863 = vunpack.c.h.b16 %v199
  %v864 = vunpack.c.l.b16 %v200
  %v865 = vunpack.c.h.b16 %v200
  %v866 = vunpack.c.l.b16 %v201
  %v867 = vunpack.c.h.b16 %v201
  %v868 = vunpack.c.l.b16 %v202
  %v869 = vunpack.c.h.b16 %v202
  %v870 = vunpack.c.l.b16 %v203
  %v871 = vunpack.c.h.b16 %v203
  %v872 = vunpack.c.l.b16 %v204
  %v873 = vunpack.c.h.b16 %v204
  %v874 = vunpack.c.l.b16 %v205
  %v875 = vunpack.c.h.b16 %v205
  %v876 = vunpack.c.l.b16 %v206
  %v877 = vunpack.c.h.b16 %v206
  %v878 = vunpack.c.l.b16 %v207
  %v879 = vunpack.c.h.b16 %v207
  %v880 = vunpack.c.l.b16 %v208
  %v881 = vunpack.c.h.b16 %v208
  %v882 = vunpack.c.l.b16 %v209
  %v883 = vunpack.c.h.b16 %v209
  %v884 = vunpack.c.l.b16 %v210
  %v885 = vunpack.c.h.b16 %v210
  %v886 = vunpack.c.l.b16 %v211
  %v887 = vunpack.c.h.b16 %v211
  %v888 = vunpack.c.l.b16 %v212
  %v889 = vunpack.c.h.b16 %v212
  %v890 = vunpack.c.l.b16 %v213
  %v891 = vunpack.c.h.b16 %v213
  %v892 = vunpack.c.l.b16 %v214
  %v893 = vunpack.c.h.b16 %v214
  %v894 = vunpack.c.l.b16 %v215
  %v895 = vunpack.c.h.b16 %v215
  %v896 = vunpack.c.l.b16 %v216
  %v897 = vunpack.c.h.b16 %v216
  %v898 = vunpack.c.l.b16 %v217
  %v899 = vunpack.c.h.b16 %v217
  %v900 = vunpack.c.l.b16 %v218
  %v901 = vunpack.c.h.b16 %v218
  %v902 = vunpack.c.l.b16 %v219
  %v903 = vunpack.c.h.b16 %v219
  %v904 = vunpack.c.l.b16 %v220
  %v905 = vunpack.c.h.b16 %v220
  %v906 = vunpack.c.l.b16 %v221
  %v907 = vunpack.c.h.b16 %v221
  %v908 = vunpack.c.l.b16 %v222
  %v909 = vunpack.c.h.b16 %v222
  %v910 = vunpack.c.l.b16 %v223
  %v911 = vunpack.c.h.b16 %v223
  %v912 = vunpack.c.l.b16 %v224
  %v913 = vunpack.c.h.b16 %v224
  %v914 = vunpack.c.l.b16 %v225
  %v915 = vunpack.c.h.b16 %v225
  %v916 = vunpack.c.l.b16 %v226
  %v917 = vunpack.c.h.b16 %v226
  %v918 = vunpack.c.l.b16 %v227
  %v919 = vunpack.c.h.b16 %v227
  %v920 = vunpack.c.l.b16 %v228
  %v921 = vunpack.c.h.b16 %v228
  %v922 = vunpack.c.l.b16 %v229
  %v923 = vunpack.c.h.b16 %v229
  %v924 = vunpack.c.l.b16 %v230
  %v925 = vunpack.c.h.b16 %v230
  %v926 = vunpack.c.l.b16 %v231
  %v927 = vunpack.c.h.b16 %v231
  %v928 = vunpack.c.l.b16 %v232
  %v929 = vunpack.c.h.b16 %v232
  %v930 = vunpack.c.l.b16 %v233
  %v931 = vunpack.c.h.b16 %v233
  %v932 = vunpack.c.l.b16 %v234
  %v933 = vunpack.c.h.b16 %v234
  %v934 = vunpack.c.l.b16 %v235
  %v935 = vunpack.c.h.b16 %v235
  %v936 = vunpack.c.l.b16 %v236
  %v937 = vunpack.c.h.b16 %v236
  %v938 = vunpack.c.l.b16 %v237
  %v939 = vunpack.c.h.b16 %v237
  %v940 = vunpack.c.l.b16 %v238
  %v941 = vunpack.c.h.b16 %v238
  %v942 = vunpack.c.l.b16 %v239
  %v943 = vunpack.c.h.b16 %v239
  %v944 = vunpack.c.l.b16 %v240
  %v945 = vunpack.c.h.b16 %v240
  %v946 = vunpack.c.l.b16 %v241
  %v947 = vunpack.c.h.b16 %v241
  %v948 = vunpack.c.l.b16 %v242
  %v949 = vunpack.c.h.b16 %v242
  %v950 = vunpack.c.l.b16 %v243
  %v951 = vunpack.c.h.b16 %v243
  %v952 = vunpack.c.l.b16 %v244
  %v953 = vunpack.c.h.b16 %v244
  %v954 = vunpack.c.l.b16 %v245
  %v955 = vunpack.c.h.b16 %v245
  %v956 = vunpack.c.l.b16 %v246
  %v957 = vunpack.c.h.b16 %v246
  %v958 = vunpack.c.l.b16 %v247
  %v959 = vunpack.c.h.b16 %v247
  %v960 = vunpack.c.l.b16 %v248
  %v961 = vunpack.c.h.b16 %v248
  %v962 = vunpack.c.l.b16 %v249
  %v963 = vunpack.c.h.b16 %v249
  %v964 = vunpack.c.l.b16 %v250
  %v965 = vunpack.c.h.b16 %v250
  %v966 = vunpack.c.l.b16 %v251
  %v967 = vunpack.c.h.b16 %v251
  %v968 = vunpack.c.l.b16 %v252
  %v969 = vunpack.c.h.b16 %v252
  %v970 = vunpack.c.l.b16 %v253
  %v971 = vunpack.c.h.b16 %v253
  %v972 = vunpack.c.l.b16 %v254
  %v973 = vunpack.c.h.b16 %v254
  %v974 = vpack.c.b16 %v530, %v526
  %v975 = vpack.c.b16 %v531, %v527
  %v976 = vpack.c.b16 %v532, %v528
  %v977 = vpack.c.b16 %v533, %v529
  %v978 = vpack.c.b16 %v538, %v534
  %v979 = vpack.c.b16 %v539, %v535
  %v980 = vpack.c.b16 %v540, %v536
  %v981 = vpack.c.b16 %v541, %v537
  %v982 = vpack.c.b16 %v546, %v542
  %v983 = vpack.c.b16 %v547, %v543
  %v984 = vpack.c.b16 %v548, %v544
  %v985 = vpack.c.b16 %v549, %v545
  %v986 = vpack.c.b16 %v554, %v550
  %v987 = vpack.c.b16 %v555, %v551
  %v988 = vpack.c.b16 %v556, %v552
  %v989 = vpack.c.b16 %v557, %v553
  %v990 = vpack.c.b16 %v562, %v558
  %v991 = vpack.c.b16 %v563, %v559
  %v992 = vpack.c.b16 %v564, %v560
  %v993 = vpack.c.b16 %v565, %v561
  %v994 = vpack.c.b16 %v570, %v566
  %v995 = vpack.c.b16 %v571, %v567
  %v996 = vpack.c.b16 %v572, %v568
  %v997 = vpack.c.b16 %v573, %v569
  %v998 = vpack.c.b16 %v578, %v574
  %v999 = vpack.c.b16 %v579, %v575
  %v1000 = vpack.c.b16 %v580, %v576
  %v1001 = vpack.c.b16 %v581, %v577
  %v1002 = vpack.c.b16 %v586, %v582
  %v1003 = vpack.c.b16 %v587, %v583
  %v1004 = vpack.c.b16 %v588, %v584
  %v1005 = vpack.c.b16 %v589, %v585
  %v1006 = vpack.c.b16 %v594, %v590
  %v1007 = vpack.c.b16 %v595, %v591
  %v1008 = vpack.c.b16 %v596, %v592
  %v1009 = vpack.c.b16 %v597, %v593
  %v1010 = vpack.c.b16 %v602, %v598
  %v1011 = vpack.c.b16 %v603, %v599
  %v1012 = vpack.c.b16 %v604, %v600
  %v1013 = vpack.c.b16 %v605, %v601
  %v1014 = vpack.c.b16 %v610, %v606
  %v1015 = vpack.c.b16 %v611, %v607
  %v1016 = vpack.c.b16 %v612, %v608
  %v1017 = vpack.c.b16 %v613, %v609
  %v1018 = vpack.c.b16 %v618, %v614
  %v1019 = vpack.c.b16 %v619, %v615
  %v1020 = vpack.c.b16 %v620, %v616
  %v1021 = vpack.c.b16 %v621, %v617
  %v1022 = vpack.c.b16 %v626, %v622
  %v1023 = vpack.c.b16 %v627, %v623
  %v1024 = vpack.c.b16 %v628, %v624
  %v1025 = vpack.c.b16 %v629, %v625
  %v1026 = vpack.c.b16 %v634, %v630
  %v1027 = vpack.c.b16 %v635, %v631
  %v1028 = vpack.c.b16 %v636, %v632
  %v1029 = vpack.c.b16 %v637, %v633
  %v1030 = vpack.c.b16 %v642, %v638
  %v1031 = vpack.c.b16 %v643, %v639
  %v1032 = vpack.c.b16 %v644, %v640
  %v1033 = vpack.c.b16 %v645, %v641
  %v1034 = vpack.c.b16 %v650, %v646
  %v1035 = vpack.c.b16 %v651, %v647
  %v1036 = vpack.c.b16 %v652, %v648
  %v1037 = vpack.c.b16 %v653, %v649
  %v1038 = vpack.c.b16 %v658, %v654
  %v1039 = vpack.c.b16 %v659, %v655
  %v1040 = vpack.c.b16 %v660, %v656
  %v1041 = vpack.c.b16 %v661, %v657
  %v1042 = vpack.c.b16 %v666, %v662
  %v1043 = vpack.c.b16 %v667, %v663
  %v1044 = vpack.c.b16 %v668, %v664
  %v1045 = vpack.c.b16 %v669, %v665
  %v1046 = vpack.c.b16 %v674, %v670
  %v1047 = vpack.c.b16 %v675, %v671
  %v1048 = vpack.c.b16 %v676, %v672
  %v1049 = vpack.c.b16 %v677, %v673
  %v1050 = vpack.c.b16 %v682, %v678
  %v1051 = vpack.c.b16 %v683, %v679
  %v1052 = vpack.c.b16 %v684, %v680
  %v1053 = vpack.c.b16 %v685, %v681
  %v1054 = vpack.c.b16 %v690, %v686
  %v1055 = vpack.c.b16 %v691, %v687
  %v1056 = vpack.c.b16 %v692, %v688
  %v1057 = vpack.c.b16 %v693, %v689
  %v1058 = vpack.c.b16 %v698, %v694
  %v1059 = vpack.c.b16 %v699, %v695
  %v1060 = vpack.c.b16 %v700, %v696
  %v1061 = vpack.c.b16 %v701, %v697
  %v1062 = vpack.c.b16 %v706, %v702
  %v1063 = vpack.c.b16 %v707, %v703
  %v1064 = vpack.c.b16 %v708, %v704
  %v1065 = vpack.c.b16 %v709, %v705
  %v1066 = vpack.c.b16 %v714, %v710
  %v1067 = vpack.c.b16 %v715, %v711
  %v1068 = vpack.c.b16 %v716, %v712
  %v1069 = vpack.c.b16 %v717, %v713
  %v1070 = vpack.c.b16 %v722, %v718
  %v1071 = vpack.c.b16 %v723, %v719
  %v1072 = vpack.c.b16 %v724, %v720
  %v1073 = vpack.c.b16 %v725, %v721
  %v1074 = vpack.c.b16 %v730, %v726
  %v1075 = vpack.c.b16 %v731, %v727
  %v1076 = vpack.c.b16 %v732, %v728
  %v1077 = vpack.c.b16 %v733, %v729
  %v1078 = vpack.c.b16 %v738, %v734
  %v1079 = vpack.c.b16 %v739, %v735
  %v1080 = vpack.c.b16 %v740, %v736
  %v1081 = vpack.c.b16 %v741, %v737
  %v1082 = vpack.c.b16 %v746, %v742
  %v1083 = vpack.c.b16 %v747, %v743
  %v1084 = vpack.c.b16 %v748, %v744
  %v1085 = vpack.c.b16 %v749, %v745
  %v1086 = vpack.c.b16 %v754, %v750
  %v1087 = vpack.c.b16 %v755, %v751
  %v1088 = vpack.c.b16 %v756, %v752
  %v1089 = vpack.c.b16 %v757, %v753
  %v1090 = vpack.c.b16 %v762, %v758
  %v1091 = vpack.c.b16 %v763, %v759
  %v1092 = vpack.c.b16 %v764, %v760
  %v1093 = vpack.c.b16 %v765, %v761
  %v1094 = vpack.c.b16 %v770, %v766
  %v1095 = vpack.c.b16 %v771, %v767
  %v1096 = vpack.c.b16 %v772, %v768
  %v1097 = vpack.c.b16 %v773, %v769
  %v1098 = vpack.c.b16 %v778, %v774
  %v1099 = vpack.c.b16 %v779, %v775
  %v1100 = vpack.c.b16 %v780, %v776
  %v1101 = vpack.c.b16 %v781, %v777
  %v1102 = vpack.c.b16 %v786, %v782
  %v1103 = vpack.c.b16 %v787, %v783
  %v1104 = vpack.c.b16 %v788, %v784
  %v1105 = vpack.c.b16 %v789, %v785
  %v1106 = vpack.c.b16 %v794, %v790
  %v1107 = vpack.c.b16 %v795, %v791
  %v1108 = vpack.c.b16 %v796, %v792
  %v1109 = vpack.c.b16 %v797, %v793
  %v1110 = vpack.c.b16 %v802, %v798
  %v1111 = vpack.c.b16 %v803, %v799
  %v1112 = vpack.c.b16 %v804, %v800
  %v1113 = vpack.c.b16 %v805, %v801
  %v1114 = vpack.c.b16 %v810, %v806
  %v1115 = vpack.c.b16 %v811, %v807
  %v1116 = vpack.c.b16 %v812, %v808
  %v1117 = vpack.c.b16 %v813, %v809
  %v1118 = vpack.c.b16 %v818, %v814
  %v1119 = vpack.c.b16 %v819, %v815
  %v1120 = vpack.c.b16 %v820, %v816
  %v1121 = vpack.c.b16 %v821, %v817
  %v1122 = vpack.c.b16 %v826, %v822
  %v1123 = vpack.c.b16 %v827, %v823
  %v1124 = vpack.c.b16 %v828, %v824
  %v1125 = vpack.c.b16 %v829, %v825
  %v1126 = vpack.c.b16 %v834, %v830
  %v1127 = vpack.c.b16 %v835, %v831
  %v1128 = vpack.c.b16 %v836, %v832
  %v1129 = vpack.c.b16 %v837, %v833
  %v1130 = vpack.c.b16 %v842, %v838
  %v1131 = vpack.c.b16 %v843, %v839
  %v1132 = vpack.c.b16 %v844, %v840
  %v1133 = vpack.c.b16 %v845, %v841
  %v1134 = vpack.c.b16 %v850, %v846
  %v1135 = vpack.c.b16 %v851, %v847
  %v1136 = vpack.c.b16 %v852, %v848
  %v1137 = vpack.c.b16 %v853, %v849
  %v1138 = vpack.c.b16 %v858, %v854
  %v1139 = vpack.c.b16 %v859, %v855
  %v1140 = vpack.c.b16 %v860, %v856
  %v1141 = vpack.c.b16 %v861, %v857
  %v1142 = vpack.c.b16 %v866, %v862
  %v1143 = vpack.c.b16 %v867, %v863
  %v1144 = vpack.c.b16 %v868, %v864
  %v1145 = vpack.c.b16 %v869, %v865
  %v1146 = vpack.c.b16 %v874, %v870
  %v1147 = vpack.c.b16 %v875, %v871
  %v1148 = vpack.c.b16 %v876, %v872
  %v1149 = vpack.c.b16 %v877, %v873
  %v1150 = vpack.c.b16 %v882, %v878
  %v1151 = vpack.c.b16 %v883, %v879
  %v1152 = vpack.c.b16 %v884, %v880
  %v1153 = vpack.c.b16 %v885, %v881
  %v1154 = vpack.c.b16 %v890, %v886
  %v1155 = vpack.c.b16 %v891, %v887
  %v1156 = vpack.c.b16 %v892, %v888
  %v1157 = vpack.c.b16 %v893, %v889
  %v1158 = vpack.c.b16 %v898, %v894
  %v1159 = vpack.c.b16 %v899, %v895
  %v1160 = vpack.c.b16 %v900, %v896
  %v1161 = vpack.c.b16 %v901, %v897
  %v1162 = vpack.c.b16 %v906, %v902
  %v1163 = vpack.c.b16 %v907, %v903
  %v1164 = vpack.c.b16 %v908, %v904
  %v1165 = vpack.c.b16 %v909, %v905
  %v1166 = vpack.c.b16 %v914, %v910
  %v1167 = vpack.c.b16 %v915, %v911
  %v1168 = vpack.c.b16 %v916, %v912
  %v1169 = vpack.c.b16 %v917, %v913
  %v1170 = vpack.c.b16 %v922, %v918
  %v1171 = vpack.c.b16 %v923, %v919
  %v1172 = vpack.c.b16 %v924, %v920
  %v1173 = vpack.c.b16 %v925, %v921
  %v1174 = vpack.c.b16 %v930, %v926
  %v1175 = vpack.c.b16 %v931, %v927
  %v1176 = vpack.c.b16 %v932, %v928
  %v1177 = vpack.c.b16 %v933, %v929
  %v1178 = vpack.c.b16 %v938, %v934
  %v1179 = vpack.c.b16 %v939, %v935
  %v1180 = vpack.c.b16 %v940, %v936
  %v1181 = vpack.c.b16 %v941, %v937
  %v1182 = vpack.c.b16 %v946, %v942
  %v1183 = vpack.c.b16 %v947, %v943
  %v1184 = vpack.c.b16 %v948, %v944
  %v1185 = vpack.c.b16 %v949, %v945
  %v1186 = vpack.c.b16 %v954, %v950
  %v1187 = vpack.c.b16 %v955, %v951
  %v1188 = vpack.c.b16 %v956, %v952
  %v1189 = vpack.c.b16 %v957, %v953
  %v1190 = vpack.c.b16 %v962, %v958
  %v1191 = vpack.c.b16 %v963, %v959
  %v1192 = vpack.c.b16 %v964, %v960
  %v1193 = vpack.c.b16 %v965, %v961
  %v1194 = vpack.c.b16 %v970, %v966
  %v1195 = vpack.c.b16 %v971, %v967
  %v1196 = vpack.c.b16 %v972, %v968
  %v1197 = vpack.c.b16 %v973, %v969
  %1422 = vmatprep.subr.bf16.mxu0 %v1003
  %1423 = vmatpush1.bf16.msra.mxu0 %v1002
  %1424 = vmatprep.subr.bf16.mxu0 %v999
  %1425 = vmatpush1.bf16.msra.mxu0 %v998
  %1426 = vmatprep.subr.bf16.mxu0 %v995
  %1427 = vmatpush1.bf16.msra.mxu0 %v994
  %1428 = vmatprep.subr.bf16.mxu0 %v991
  %1429 = vmatpush1.bf16.msra.mxu0 %v990
  %1430 = vmatprep.subr.bf16.mxu0 %v987
  %1431 = vmatpush1.bf16.msra.mxu0 %v986
  %1432 = vmatprep.subr.bf16.mxu0 %v983
  %1433 = vmatpush1.bf16.msra.mxu0 %v982
  %1434 = vmatprep.subr.bf16.mxu0 %v979
  %1435 = vmatpush1.bf16.msra.mxu0 %v978
  %1436 = vmatprep.subr.bf16.mxu0 %v975
  %1437 = vmatpush1.bf16.msra.mxu0 %v974
  %1438 = vmatprep.subr.bf16.mxu0 %v1035
  %1439 = vmatpush2.bf16.msra.mxu0 %v1034
  %1440 = vmatprep.subr.bf16.mxu0 %v1031
  %1441 = vmatpush2.bf16.msra.mxu0 %v1030
  %1442 = vmatprep.subr.bf16.mxu0 %v1027
  %1443 = vmatpush2.bf16.msra.mxu0 %v1026
  %1444 = vmatprep.subr.bf16.mxu0 %v1023
  %1445 = vmatpush2.bf16.msra.mxu0 %v1022
  %1446 = vmatprep.subr.bf16.mxu0 %v1019
  %1447 = vmatpush2.bf16.msra.mxu0 %v1018
  %1448 = vmatprep.subr.bf16.mxu0 %v1015
  %1449 = vmatpush2.bf16.msra.mxu0 %v1014
  %1450 = vmatprep.subr.bf16.mxu0 %v1011
  %1451 = vmatpush2.bf16.msra.mxu0 %v1010
  %1452 = vmatprep.subr.bf16.mxu0 %v1007
  %1453 = vmatpush2.bf16.msra.mxu0 %v1006
  %1454 = vmatprep.mubr.bf16.mxu0 %v289
  %1455 = vmatmul.mubr.bf16.gmra.mxu0 %v288
  %v1456 = vpop.f32.mrf.mxu0
  %v1457 = vadd.f32 %v260, %v1456
  %v1458 = vpop.f32.mrf.mxu0
  %v1459 = vadd.f32 %v264, %v1458
  %v1460 = vpop.f32.mrf.mxu0
  %v1461 = vpop.f32.mrf.mxu0
  %1462 = vdwg.mxu0
  %1463 = vmatprep.subr.bf16.mxu0 %v1067
  %1464 = vmatpush1.bf16.msra.mxu0 %v1066
  %1465 = vmatprep.subr.bf16.mxu0 %v1063
  %1466 = vmatpush1.bf16.msra.mxu0 %v1062
  %1467 = vmatprep.subr.bf16.mxu0 %v1059
  %1468 = vmatpush1.bf16.msra.mxu0 %v1058
  %1469 = vmatprep.subr.bf16.mxu0 %v1055
  %1470 = vmatpush1.bf16.msra.mxu0 %v1054
  %1471 = vmatprep.subr.bf16.mxu0 %v1051
  %1472 = vmatpush1.bf16.msra.mxu0 %v1050
  %1473 = vmatprep.subr.bf16.mxu0 %v1047
  %1474 = vmatpush1.bf16.msra.mxu0 %v1046
  %1475 = vmatprep.subr.bf16.mxu0 %v1043
  %1476 = vmatpush1.bf16.msra.mxu0 %v1042
  %1477 = vmatprep.subr.bf16.mxu0 %v1039
  %1478 = vmatpush1.bf16.msra.mxu0 %v1038
  %1479 = vmatprep.subr.bf16.mxu0 %v1099
  %1480 = vmatpush2.bf16.msra.mxu0 %v1098
  %1481 = vmatprep.subr.bf16.mxu0 %v1095
  %1482 = vmatpush2.bf16.msra.mxu0 %v1094
  %1483 = vmatprep.subr.bf16.mxu0 %v1091
  %1484 = vmatpush2.bf16.msra.mxu0 %v1090
  %1485 = vmatprep.subr.bf16.mxu0 %v1087
  %1486 = vmatpush2.bf16.msra.mxu0 %v1086
  %1487 = vmatprep.subr.bf16.mxu0 %v1083
  %1488 = vmatpush2.bf16.msra.mxu0 %v1082
  %1489 = vmatprep.subr.bf16.mxu0 %v1079
  %1490 = vmatpush2.bf16.msra.mxu0 %v1078
  %1491 = vmatprep.subr.bf16.mxu0 %v1075
  %1492 = vmatpush2.bf16.msra.mxu0 %v1074
  %1493 = vmatprep.subr.bf16.mxu0 %v1071
  %1494 = vmatpush2.bf16.msra.mxu0 %v1070
  %1495 = vmatprep.mubr.bf16.mxu0 %v291
  %1496 = vmatmul.mubr.bf16.gmra.mxu0 %v290
  %v1497 = vpop.f32.mrf.mxu0
  %v1498 = vadd.f32 %v1457, %v1497
  %v1499 = vpop.f32.mrf.mxu0
  %v1500 = vadd.f32 %v1459, %v1499
  %v1501 = vpop.f32.mrf.mxu0
  %v1502 = vpop.f32.mrf.mxu0
  %1503 = vdwg.mxu0
  %1504 = vmatprep.subr.bf16.mxu0 %v1131
  %1505 = vmatpush1.bf16.msra.mxu0 %v1130
  %1506 = vmatprep.subr.bf16.mxu0 %v1127
  %1507 = vmatpush1.bf16.msra.mxu0 %v1126
  %1508 = vmatprep.subr.bf16.mxu0 %v1123
  %1509 = vmatpush1.bf16.msra.mxu0 %v1122
  %1510 = vmatprep.subr.bf16.mxu0 %v1119
  %1511 = vmatpush1.bf16.msra.mxu0 %v1118
  %1512 = vmatprep.subr.bf16.mxu0 %v1115
  %1513 = vmatpush1.bf16.msra.mxu0 %v1114
  %1514 = vmatprep.subr.bf16.mxu0 %v1111
  %1515 = vmatpush1.bf16.msra.mxu0 %v1110
  %1516 = vmatprep.subr.bf16.mxu0 %v1107
  %1517 = vmatpush1.bf16.msra.mxu0 %v1106
  %1518 = vmatprep.subr.bf16.mxu0 %v1103
  %1519 = vmatpush1.bf16.msra.mxu0 %v1102
  %1520 = vmatprep.subr.bf16.mxu0 %v1163
  %1521 = vmatpush2.bf16.msra.mxu0 %v1162
  %1522 = vmatprep.subr.bf16.mxu0 %v1159
  %1523 = vmatpush2.bf16.msra.mxu0 %v1158
  %1524 = vmatprep.subr.bf16.mxu0 %v1155
  %1525 = vmatpush2.bf16.msra.mxu0 %v1154
  %1526 = vmatprep.subr.bf16.mxu0 %v1151
  %1527 = vmatpush2.bf16.msra.mxu0 %v1150
  %1528 = vmatprep.subr.bf16.mxu0 %v1147
  %1529 = vmatpush2.bf16.msra.mxu0 %v1146
  %1530 = vmatprep.subr.bf16.mxu0 %v1143
  %1531 = vmatpush2.bf16.msra.mxu0 %v1142
  %1532 = vmatprep.subr.bf16.mxu0 %v1139
  %1533 = vmatpush2.bf16.msra.mxu0 %v1138
  %1534 = vmatprep.subr.bf16.mxu0 %v1135
  %1535 = vmatpush2.bf16.msra.mxu0 %v1134
  %1536 = vmatprep.mubr.bf16.mxu0 %v293
  %1537 = vmatmul.mubr.bf16.gmra.mxu0 %v292
  %v1538 = vpop.f32.mrf.mxu0
  %v1539 = vadd.f32 %v1498, %v1538
  %v1540 = vpop.f32.mrf.mxu0
  %v1541 = vadd.f32 %v1500, %v1540
  %v1542 = vpop.f32.mrf.mxu0
  %v1543 = vpop.f32.mrf.mxu0
  %1544 = vdwg.mxu0
  %1545 = vmatprep.subr.bf16.mxu0 %v1195
  %1546 = vmatpush1.bf16.msra.mxu0 %v1194
  %1547 = vmatprep.subr.bf16.mxu0 %v1191
  %1548 = vmatpush1.bf16.msra.mxu0 %v1190
  %1549 = vmatprep.subr.bf16.mxu0 %v1187
  %1550 = vmatpush1.bf16.msra.mxu0 %v1186
  %1551 = vmatprep.subr.bf16.mxu0 %v1183
  %1552 = vmatpush1.bf16.msra.mxu0 %v1182
  %1553 = vmatprep.subr.bf16.mxu0 %v1179
  %1554 = vmatpush1.bf16.msra.mxu0 %v1178
  %1555 = vmatprep.subr.bf16.mxu0 %v1175
  %1556 = vmatpush1.bf16.msra.mxu0 %v1174
  %1557 = vmatprep.subr.bf16.mxu0 %v1171
  %1558 = vmatpush1.bf16.msra.mxu0 %v1170
  %1559 = vmatprep.subr.bf16.mxu0 %v1167
  %1560 = vmatpush1.bf16.msra.mxu0 %v1166
  %1561 = vmatprep.subr.bf16.mxu0 0
  %1562 = vmatpush2.bf16.msra.mxu0 0
  %1563 = vmatprep.subr.bf16.mxu0 0
  %1564 = vmatpush2.bf16.msra.mxu0 0
  %1565 = vmatprep.subr.bf16.mxu0 0
  %1566 = vmatpush2.bf16.msra.mxu0 0
  %1567 = vmatprep.subr.bf16.mxu0 0
  %1568 = vmatpush2.bf16.msra.mxu0 0
  %1569 = vmatprep.subr.bf16.mxu0 0
  %1570 = vmatpush2.bf16.msra.mxu0 0
  %1571 = vmatprep.subr.bf16.mxu0 0
  %1572 = vmatpush2.bf16.msra.mxu0 0
  %1573 = vmatprep.subr.bf16.mxu0 0
  %1574 = vmatpush2.bf16.msra.mxu0 0
  %1575 = vmatprep.subr.bf16.mxu0 0
  %1576 = vmatpush2.bf16.msra.mxu0 0
  %1577 = vmatprep.mubr.bf16.mxu0 0
  %1578 = vmatmul.mubr.bf16.gmra.mxu0 %v294
  %v1579 = vpop.f32.mrf.mxu0
  %v1580 = vadd.f32 %v1539, %v1579
  %v1581 = vpop.f32.mrf.mxu0
  %v1582 = vadd.f32 %v1541, %v1581
  %v1583 = vpop.f32.mrf.mxu0
  %v1584 = vpop.f32.mrf.mxu0
  %1585 = vdwg.mxu0
  %1586 = vmatprep.subr.bf16.mxu0 %v1005
  %1587 = vmatpush1.bf16.msra.mxu0 %v1004
  %1588 = vmatprep.subr.bf16.mxu0 %v1001
  %1589 = vmatpush1.bf16.msra.mxu0 %v1000
  %1590 = vmatprep.subr.bf16.mxu0 %v997
  %1591 = vmatpush1.bf16.msra.mxu0 %v996
  %1592 = vmatprep.subr.bf16.mxu0 %v993
  %1593 = vmatpush1.bf16.msra.mxu0 %v992
  %1594 = vmatprep.subr.bf16.mxu0 %v989
  %1595 = vmatpush1.bf16.msra.mxu0 %v988
  %1596 = vmatprep.subr.bf16.mxu0 %v985
  %1597 = vmatpush1.bf16.msra.mxu0 %v984
  %1598 = vmatprep.subr.bf16.mxu0 %v981
  %1599 = vmatpush1.bf16.msra.mxu0 %v980
  %1600 = vmatprep.subr.bf16.mxu0 %v977
  %1601 = vmatpush1.bf16.msra.mxu0 %v976
  %1602 = vmatprep.subr.bf16.mxu0 %v1037
  %1603 = vmatpush2.bf16.msra.mxu0 %v1036
  %1604 = vmatprep.subr.bf16.mxu0 %v1033
  %1605 = vmatpush2.bf16.msra.mxu0 %v1032
  %1606 = vmatprep.subr.bf16.mxu0 %v1029
  %1607 = vmatpush2.bf16.msra.mxu0 %v1028
  %1608 = vmatprep.subr.bf16.mxu0 %v1025
  %1609 = vmatpush2.bf16.msra.mxu0 %v1024
  %1610 = vmatprep.subr.bf16.mxu0 %v1021
  %1611 = vmatpush2.bf16.msra.mxu0 %v1020
  %1612 = vmatprep.subr.bf16.mxu0 %v1017
  %1613 = vmatpush2.bf16.msra.mxu0 %v1016
  %1614 = vmatprep.subr.bf16.mxu0 %v1013
  %1615 = vmatpush2.bf16.msra.mxu0 %v1012
  %1616 = vmatprep.subr.bf16.mxu0 %v1009
  %1617 = vmatpush2.bf16.msra.mxu0 %v1008
  %1618 = vmatprep.mubr.bf16.mxu0 %v289
  %1619 = vmatmul.mubr.bf16.gmra.mxu0 %v288
  %v1620 = vpop.f32.mrf.mxu0
  %v1621 = vadd.f32 %v268, %v1620
  %v1622 = vpop.f32.mrf.mxu0
  %v1623 = vadd.f32 %v272, %v1622
  %v1624 = vpop.f32.mrf.mxu0
  %v1625 = vpop.f32.mrf.mxu0
  %1626 = vdwg.mxu0
  %1627 = vmatprep.subr.bf16.mxu0 %v1069
  %1628 = vmatpush1.bf16.msra.mxu0 %v1068
  %1629 = vmatprep.subr.bf16.mxu0 %v1065
  %1630 = vmatpush1.bf16.msra.mxu0 %v1064
  %1631 = vmatprep.subr.bf16.mxu0 %v1061
  %1632 = vmatpush1.bf16.msra.mxu0 %v1060
  %1633 = vmatprep.subr.bf16.mxu0 %v1057
  %1634 = vmatpush1.bf16.msra.mxu0 %v1056
  %1635 = vmatprep.subr.bf16.mxu0 %v1053
  %1636 = vmatpush1.bf16.msra.mxu0 %v1052
  %1637 = vmatprep.subr.bf16.mxu0 %v1049
  %1638 = vmatpush1.bf16.msra.mxu0 %v1048
  %1639 = vmatprep.subr.bf16.mxu0 %v1045
  %1640 = vmatpush1.bf16.msra.mxu0 %v1044
  %1641 = vmatprep.subr.bf16.mxu0 %v1041
  %1642 = vmatpush1.bf16.msra.mxu0 %v1040
  %1643 = vmatprep.subr.bf16.mxu0 %v1101
  %1644 = vmatpush2.bf16.msra.mxu0 %v1100
  %1645 = vmatprep.subr.bf16.mxu0 %v1097
  %1646 = vmatpush2.bf16.msra.mxu0 %v1096
  %1647 = vmatprep.subr.bf16.mxu0 %v1093
  %1648 = vmatpush2.bf16.msra.mxu0 %v1092
  %1649 = vmatprep.subr.bf16.mxu0 %v1089
  %1650 = vmatpush2.bf16.msra.mxu0 %v1088
  %1651 = vmatprep.subr.bf16.mxu0 %v1085
  %1652 = vmatpush2.bf16.msra.mxu0 %v1084
  %1653 = vmatprep.subr.bf16.mxu0 %v1081
  %1654 = vmatpush2.bf16.msra.mxu0 %v1080
  %1655 = vmatprep.subr.bf16.mxu0 %v1077
  %1656 = vmatpush2.bf16.msra.mxu0 %v1076
  %1657 = vmatprep.subr.bf16.mxu0 %v1073
  %1658 = vmatpush2.bf16.msra.mxu0 %v1072
  %1659 = vmatprep.mubr.bf16.mxu0 %v291
  %1660 = vmatmul.mubr.bf16.gmra.mxu0 %v290
  %v1661 = vpop.f32.mrf.mxu0
  %v1662 = vadd.f32 %v1621, %v1661
  %v1663 = vpop.f32.mrf.mxu0
  %v1664 = vadd.f32 %v1623, %v1663
  %v1665 = vpop.f32.mrf.mxu0
  %v1666 = vpop.f32.mrf.mxu0
  %1667 = vdwg.mxu0
  %1668 = vmatprep.subr.bf16.mxu0 %v1133
  %1669 = vmatpush1.bf16.msra.mxu0 %v1132
  %1670 = vmatprep.subr.bf16.mxu0 %v1129
  %1671 = vmatpush1.bf16.msra.mxu0 %v1128
  %1672 = vmatprep.subr.bf16.mxu0 %v1125
  %1673 = vmatpush1.bf16.msra.mxu0 %v1124
  %1674 = vmatprep.subr.bf16.mxu0 %v1121
  %1675 = vmatpush1.bf16.msra.mxu0 %v1120
  %1676 = vmatprep.subr.bf16.mxu0 %v1117
  %1677 = vmatpush1.bf16.msra.mxu0 %v1116
  %1678 = vmatprep.subr.bf16.mxu0 %v1113
  %1679 = vmatpush1.bf16.msra.mxu0 %v1112
  %1680 = vmatprep.subr.bf16.mxu0 %v1109
  %1681 = vmatpush1.bf16.msra.mxu0 %v1108
  %1682 = vmatprep.subr.bf16.mxu0 %v1105
  %1683 = vmatpush1.bf16.msra.mxu0 %v1104
  %1684 = vmatprep.subr.bf16.mxu0 %v1165
  %1685 = vmatpush2.bf16.msra.mxu0 %v1164
  %1686 = vmatprep.subr.bf16.mxu0 %v1161
  %1687 = vmatpush2.bf16.msra.mxu0 %v1160
  %1688 = vmatprep.subr.bf16.mxu0 %v1157
  %1689 = vmatpush2.bf16.msra.mxu0 %v1156
  %1690 = vmatprep.subr.bf16.mxu0 %v1153
  %1691 = vmatpush2.bf16.msra.mxu0 %v1152
  %1692 = vmatprep.subr.bf16.mxu0 %v1149
  %1693 = vmatpush2.bf16.msra.mxu0 %v1148
  %1694 = vmatprep.subr.bf16.mxu0 %v1145
  %1695 = vmatpush2.bf16.msra.mxu0 %v1144
  %1696 = vmatprep.subr.bf16.mxu0 %v1141
  %1697 = vmatpush2.bf16.msra.mxu0 %v1140
  %1698 = vmatprep.subr.bf16.mxu0 %v1137
  %1699 = vmatpush2.bf16.msra.mxu0 %v1136
  %1700 = vmatprep.mubr.bf16.mxu0 %v293
  %1701 = vmatmul.mubr.bf16.gmra.mxu0 %v292
  %v1702 = vpop.f32.mrf.mxu0
  %v1703 = vadd.f32 %v1662, %v1702
  %v1704 = vpop.f32.mrf.mxu0
  %v1705 = vadd.f32 %v1664, %v1704
  %v1706 = vpop.f32.mrf.mxu0
  %v1707 = vpop.f32.mrf.mxu0
  %1708 = vdwg.mxu0
  %1709 = vmatprep.subr.bf16.mxu0 %v1197
  %1710 = vmatpush1.bf16.msra.mxu0 %v1196
  %1711 = vmatprep.subr.bf16.mxu0 %v1193
  %1712 = vmatpush1.bf16.msra.mxu0 %v1192
  %1713 = vmatprep.subr.bf16.mxu0 %v1189
  %1714 = vmatpush1.bf16.msra.mxu0 %v1188
  %1715 = vmatprep.subr.bf16.mxu0 %v1185
  %1716 = vmatpush1.bf16.msra.mxu0 %v1184
  %1717 = vmatprep.subr.bf16.mxu0 %v1181
  %1718 = vmatpush1.bf16.msra.mxu0 %v1180
  %1719 = vmatprep.subr.bf16.mxu0 %v1177
  %1720 = vmatpush1.bf16.msra.mxu0 %v1176
  %1721 = vmatprep.subr.bf16.mxu0 %v1173
  %1722 = vmatpush1.bf16.msra.mxu0 %v1172
  %1723 = vmatprep.subr.bf16.mxu0 %v1169
  %1724 = vmatpush1.bf16.msra.mxu0 %v1168
  %1725 = vmatprep.subr.bf16.mxu0 0
  %1726 = vmatpush2.bf16.msra.mxu0 0
  %1727 = vmatprep.subr.bf16.mxu0 0
  %1728 = vmatpush2.bf16.msra.mxu0 0
  %1729 = vmatprep.subr.bf16.mxu0 0
  %1730 = vmatpush2.bf16.msra.mxu0 0
  %1731 = vmatprep.subr.bf16.mxu0 0
  %1732 = vmatpush2.bf16.msra.mxu0 0
  %1733 = vmatprep.subr.bf16.mxu0 0
  %1734 = vmatpush2.bf16.msra.mxu0 0
  %1735 = vmatprep.subr.bf16.mxu0 0
  %1736 = vmatpush2.bf16.msra.mxu0 0
  %1737 = vmatprep.subr.bf16.mxu0 0
  %1738 = vmatpush2.bf16.msra.mxu0 0
  %1739 = vmatprep.subr.bf16.mxu0 0
  %1740 = vmatpush2.bf16.msra.mxu0 0
  %1741 = vmatprep.mubr.bf16.mxu0 0
  %1742 = vmatmul.mubr.bf16.gmra.mxu0 %v294
  %v1743 = vpop.f32.mrf.mxu0
  %v1744 = vadd.f32 %v1703, %v1743
  %v1745 = vpop.f32.mrf.mxu0
  %v1746 = vadd.f32 %v1705, %v1745
  %v1747 = vpop.f32.mrf.mxu0
  %v1748 = vpop.f32.mrf.mxu0
  %1749 = vdwg.mxu0
  %v1750 = vmax.f32 %v1580, 0.0
  %v1751 = vmax.f32 %v1582, 0.0
  %v1752 = vmax.f32 %v1744, 0.0
  %v1753 = vmax.f32 %v1746, 0.0
  %v1754 = vpack.c.bf16 %v1750, %v1750
  %v1755 = vpack.c.bf16 %v1751, %v1751
  %v1756 = vpack.c.bf16 %v1752, %v1752
  %v1757 = vpack.c.bf16 %v1753, %v1753
  %v1758 = vld [vmem:[%s3] sm:$0xff]
  %v1759 = vld [vmem:[%s3 + $0x8] sm:$0xff]
  %v1760 = vld [vmem:[%s3 + $0x10] sm:$0xff]
  %v1761 = vld [vmem:[%s3 + $0x18] sm:$0xff]
  %v1762 = vld [vmem:[%s3 + $0x20] sm:$0xff]
  %v1763 = vld [vmem:[%s3 + $0x28] sm:$0xff]
  %v1764 = vld [vmem:[%s3 + $0x30] sm:$0xff]
  %v1765 = vld [vmem:[%s3 + $0x38] sm:$0xff]
  %v1766 = vld [vmem:[%s3 + $0x40] sm:$0xff]
  %v1767 = vld [vmem:[%s3 + $0x48] sm:$0xff]
  %v1768 = vld [vmem:[%s3 + $0x50] sm:$0xff]
  %v1769 = vld [vmem:[%s3 + $0x58] sm:$0xff]
  %v1770 = vld [vmem:[%s3 + $0x60] sm:$0xff]
  %v1771 = vld [vmem:[%s3 + $0x68] sm:$0xff]
  %v1772 = vld [vmem:[%s3 + $0x70] sm:$0xff]
  %v1773 = vld [vmem:[%s3 + $0x78] sm:$0xff]
  %v1774 = vld [vmem:[%s3 + $0x80] sm:$0xff]
  %v1775 = vld [vmem:[%s3 + $0x88] sm:$0xff]
  %v1776 = vld [vmem:[%s3 + $0x90] sm:$0xff]
  %v1777 = vld [vmem:[%s3 + $0x98] sm:$0xff]
  %v1778 = vld [vmem:[%s3 + $0xa0] sm:$0xff]
  %v1779 = vld [vmem:[%s3 + $0xa8] sm:$0xff]
  %v1780 = vld [vmem:[%s3 + $0xb0] sm:$0xff]
  %v1781 = vld [vmem:[%s3 + $0xb8] sm:$0xff]
  %v1782 = vld [vmem:[%s3 + $0xc0] sm:$0xff]
  %v1783 = vld [vmem:[%s3 + $0xc8] sm:$0xff]
  %v1784 = vld [vmem:[%s3 + $0xd0] sm:$0xff]
  %v1785 = vld [vmem:[%s3 + $0xd8] sm:$0xff]
  %v1786 = vld [vmem:[%s3 + $0xe0] sm:$0xff]
  %v1787 = vld [vmem:[%s3 + $0xe8] sm:$0xff]
  %v1788 = vld [vmem:[%s3 + $0xf0] sm:$0xff]
  %v1789 = vld [vmem:[%s3 + $0xf8] sm:$0xff]
  %v1790 = vld [vmem:[%s3 + $0x100] sm:$0xff]
  %v1791 = vld [vmem:[%s3 + $0x108] sm:$0xff]
  %v1792 = vld [vmem:[%s3 + $0x110] sm:$0xff]
  %v1793 = vld [vmem:[%s3 + $0x118] sm:$0xff]
  %v1794 = vld [vmem:[%s3 + $0x120] sm:$0xff]
  %v1795 = vld [vmem:[%s3 + $0x128] sm:$0xff]
  %v1796 = vld [vmem:[%s3 + $0x130] sm:$0xff]
  %v1797 = vld [vmem:[%s3 + $0x138] sm:$0xff]
  %v1798 = vld [vmem:[%s3 + $0x140] sm:$0xff]
  %v1799 = vld [vmem:[%s3 + $0x148] sm:$0xff]
  %v1800 = vld [vmem:[%s3 + $0x150] sm:$0xff]
  %v1801 = vld [vmem:[%s3 + $0x158] sm:$0xff]
  %v1802 = vld [vmem:[%s3 + $0x160] sm:$0xff]
  %v1803 = vld [vmem:[%s3 + $0x168] sm:$0xff]
  %v1804 = vld [vmem:[%s3 + $0x170] sm:$0xff]
  %v1805 = vld [vmem:[%s3 + $0x178] sm:$0xff]
  %v1806 = vld [vmem:[%s3 + $0x180] sm:$0xff]
  %v1807 = vld [vmem:[%s3 + $0x188] sm:$0xff]
  %v1808 = vld [vmem:[%s3 + $0x190] sm:$0xff]
  %v1809 = vld [vmem:[%s3 + $0x198] sm:$0xff]
  %v1810 = vld [vmem:[%s3 + $0x1a0] sm:$0xff]
  %v1811 = vld [vmem:[%s3 + $0x1a8] sm:$0xff]
  %v1812 = vld [vmem:[%s3 + $0x1b0] sm:$0xff]
  %v1813 = vld [vmem:[%s3 + $0x1b8] sm:$0xff]
  %v1814 = vld [vmem:[%s3 + $0x1c0] sm:$0xff]
  %v1815 = vld [vmem:[%s3 + $0x1c8] sm:$0xff]
  %v1816 = vld [vmem:[%s3 + $0x1d0] sm:$0xff]
  %v1817 = vld [vmem:[%s3 + $0x1d8] sm:$0xff]
  %v1818 = vld [vmem:[%s3 + $0x1e0] sm:$0xff]
  %v1819 = vld [vmem:[%s3 + $0x1e8] sm:$0xff]
  %v1820 = vld [vmem:[%s3 + $0x1f0] sm:$0xff]
  %v1821 = vld [vmem:[%s3 + $0x1f8] sm:$0xff]
  %v1822 = vld [vmem:[%s4] sm:$0x3]
  %v1824 = vlaneseq
  %v1825 = vshrl.u32 %v1824, 7
  %v1826 = vsub.s32 0, %v1825
  %v1827 = vrot.slane %v1822, %v1826
  %v1828 = vlaneseq
  %v1829 = vshrl.u32 %v1828, 7
  %v1830 = vsub.s32 1, %v1829
  %v1831 = vrot.slane %v1822, %v1830
  %v1898 = vunpack.c.l.b16 %v1758
  %v1899 = vunpack.c.h.b16 %v1758
  %v1900 = vunpack.c.l.b16 %v1759
  %v1901 = vunpack.c.h.b16 %v1759
  %v1902 = vunpack.c.l.b16 %v1760
  %v1903 = vunpack.c.h.b16 %v1760
  %v1904 = vunpack.c.l.b16 %v1761
  %v1905 = vunpack.c.h.b16 %v1761
  %v1906 = vunpack.c.l.b16 %v1762
  %v1907 = vunpack.c.h.b16 %v1762
  %v1908 = vunpack.c.l.b16 %v1763
  %v1909 = vunpack.c.h.b16 %v1763
  %v1910 = vunpack.c.l.b16 %v1764
  %v1911 = vunpack.c.h.b16 %v1764
  %v1912 = vunpack.c.l.b16 %v1765
  %v1913 = vunpack.c.h.b16 %v1765
  %v1914 = vunpack.c.l.b16 %v1766
  %v1915 = vunpack.c.h.b16 %v1766
  %v1916 = vunpack.c.l.b16 %v1767
  %v1917 = vunpack.c.h.b16 %v1767
  %v1918 = vunpack.c.l.b16 %v1768
  %v1919 = vunpack.c.h.b16 %v1768
  %v1920 = vunpack.c.l.b16 %v1769
  %v1921 = vunpack.c.h.b16 %v1769
  %v1922 = vunpack.c.l.b16 %v1770
  %v1923 = vunpack.c.h.b16 %v1770
  %v1924 = vunpack.c.l.b16 %v1771
  %v1925 = vunpack.c.h.b16 %v1771
  %v1926 = vunpack.c.l.b16 %v1772
  %v1927 = vunpack.c.h.b16 %v1772
  %v1928 = vunpack.c.l.b16 %v1773
  %v1929 = vunpack.c.h.b16 %v1773
  %v1930 = vunpack.c.l.b16 %v1774
  %v1931 = vunpack.c.h.b16 %v1774
  %v1932 = vunpack.c.l.b16 %v1775
  %v1933 = vunpack.c.h.b16 %v1775
  %v1934 = vunpack.c.l.b16 %v1776
  %v1935 = vunpack.c.h.b16 %v1776
  %v1936 = vunpack.c.l.b16 %v1777
  %v1937 = vunpack.c.h.b16 %v1777
  %v1938 = vunpack.c.l.b16 %v1778
  %v1939 = vunpack.c.h.b16 %v1778
  %v1940 = vunpack.c.l.b16 %v1779
  %v1941 = vunpack.c.h.b16 %v1779
  %v1942 = vunpack.c.l.b16 %v1780
  %v1943 = vunpack.c.h.b16 %v1780
  %v1944 = vunpack.c.l.b16 %v1781
  %v1945 = vunpack.c.h.b16 %v1781
  %v1946 = vunpack.c.l.b16 %v1782
  %v1947 = vunpack.c.h.b16 %v1782
  %v1948 = vunpack.c.l.b16 %v1783
  %v1949 = vunpack.c.h.b16 %v1783
  %v1950 = vunpack.c.l.b16 %v1784
  %v1951 = vunpack.c.h.b16 %v1784
  %v1952 = vunpack.c.l.b16 %v1785
  %v1953 = vunpack.c.h.b16 %v1785
  %v1954 = vunpack.c.l.b16 %v1786
  %v1955 = vunpack.c.h.b16 %v1786
  %v1956 = vunpack.c.l.b16 %v1787
  %v1957 = vunpack.c.h.b16 %v1787
  %v1958 = vunpack.c.l.b16 %v1788
  %v1959 = vunpack.c.h.b16 %v1788
  %v1960 = vunpack.c.l.b16 %v1789
  %v1961 = vunpack.c.h.b16 %v1789
  %v1962 = vunpack.c.l.b16 %v1790
  %v1963 = vunpack.c.h.b16 %v1790
  %v1964 = vunpack.c.l.b16 %v1791
  %v1965 = vunpack.c.h.b16 %v1791
  %v1966 = vunpack.c.l.b16 %v1792
  %v1967 = vunpack.c.h.b16 %v1792
  %v1968 = vunpack.c.l.b16 %v1793
  %v1969 = vunpack.c.h.b16 %v1793
  %v1970 = vunpack.c.l.b16 %v1794
  %v1971 = vunpack.c.h.b16 %v1794
  %v1972 = vunpack.c.l.b16 %v1795
  %v1973 = vunpack.c.h.b16 %v1795
  %v1974 = vunpack.c.l.b16 %v1796
  %v1975 = vunpack.c.h.b16 %v1796
  %v1976 = vunpack.c.l.b16 %v1797
  %v1977 = vunpack.c.h.b16 %v1797
  %v1978 = vunpack.c.l.b16 %v1798
  %v1979 = vunpack.c.h.b16 %v1798
  %v1980 = vunpack.c.l.b16 %v1799
  %v1981 = vunpack.c.h.b16 %v1799
  %v1982 = vunpack.c.l.b16 %v1800
  %v1983 = vunpack.c.h.b16 %v1800
  %v1984 = vunpack.c.l.b16 %v1801
  %v1985 = vunpack.c.h.b16 %v1801
  %v1986 = vunpack.c.l.b16 %v1802
  %v1987 = vunpack.c.h.b16 %v1802
  %v1988 = vunpack.c.l.b16 %v1803
  %v1989 = vunpack.c.h.b16 %v1803
  %v1990 = vunpack.c.l.b16 %v1804
  %v1991 = vunpack.c.h.b16 %v1804
  %v1992 = vunpack.c.l.b16 %v1805
  %v1993 = vunpack.c.h.b16 %v1805
  %v1994 = vunpack.c.l.b16 %v1806
  %v1995 = vunpack.c.h.b16 %v1806
  %v1996 = vunpack.c.l.b16 %v1807
  %v1997 = vunpack.c.h.b16 %v1807
  %v1998 = vunpack.c.l.b16 %v1808
  %v1999 = vunpack.c.h.b16 %v1808
  %v2000 = vunpack.c.l.b16 %v1809
  %v2001 = vunpack.c.h.b16 %v1809
  %v2002 = vunpack.c.l.b16 %v1810
  %v2003 = vunpack.c.h.b16 %v1810
  %v2004 = vunpack.c.l.b16 %v1811
  %v2005 = vunpack.c.h.b16 %v1811
  %v2006 = vunpack.c.l.b16 %v1812
  %v2007 = vunpack.c.h.b16 %v1812
  %v2008 = vunpack.c.l.b16 %v1813
  %v2009 = vunpack.c.h.b16 %v1813
  %v2010 = vunpack.c.l.b16 %v1814
  %v2011 = vunpack.c.h.b16 %v1814
  %v2012 = vunpack.c.l.b16 %v1815
  %v2013 = vunpack.c.h.b16 %v1815
  %v2014 = vunpack.c.l.b16 %v1816
  %v2015 = vunpack.c.h.b16 %v1816
  %v2016 = vunpack.c.l.b16 %v1817
  %v2017 = vunpack.c.h.b16 %v1817
  %v2018 = vunpack.c.l.b16 %v1818
  %v2019 = vunpack.c.h.b16 %v1818
  %v2020 = vunpack.c.l.b16 %v1819
  %v2021 = vunpack.c.h.b16 %v1819
  %v2022 = vunpack.c.l.b16 %v1820
  %v2023 = vunpack.c.h.b16 %v1820
  %v2024 = vunpack.c.l.b16 %v1821
  %v2025 = vunpack.c.h.b16 %v1821
  %v2026 = vpack.c.b16 %v1900, %v1898
  %v2027 = vpack.c.b16 %v1901, %v1899
  %v2028 = vpack.c.b16 %v1904, %v1902
  %v2029 = vpack.c.b16 %v1905, %v1903
  %v2030 = vpack.c.b16 %v1908, %v1906
  %v2031 = vpack.c.b16 %v1909, %v1907
  %v2032 = vpack.c.b16 %v1912, %v1910
  %v2033 = vpack.c.b16 %v1913, %v1911
  %v2034 = vpack.c.b16 %v1916, %v1914
  %v2035 = vpack.c.b16 %v1917, %v1915
  %v2036 = vpack.c.b16 %v1920, %v1918
  %v2037 = vpack.c.b16 %v1921, %v1919
  %v2038 = vpack.c.b16 %v1924, %v1922
  %v2039 = vpack.c.b16 %v1925, %v1923
  %v2040 = vpack.c.b16 %v1928, %v1926
  %v2041 = vpack.c.b16 %v1929, %v1927
  %v2042 = vpack.c.b16 %v1932, %v1930
  %v2043 = vpack.c.b16 %v1933, %v1931
  %v2044 = vpack.c.b16 %v1936, %v1934
  %v2045 = vpack.c.b16 %v1937, %v1935
  %v2046 = vpack.c.b16 %v1940, %v1938
  %v2047 = vpack.c.b16 %v1941, %v1939
  %v2048 = vpack.c.b16 %v1944, %v1942
  %v2049 = vpack.c.b16 %v1945, %v1943
  %v2050 = vpack.c.b16 %v1948, %v1946
  %v2051 = vpack.c.b16 %v1949, %v1947
  %v2052 = vpack.c.b16 %v1952, %v1950
  %v2053 = vpack.c.b16 %v1953, %v1951
  %v2054 = vpack.c.b16 %v1956, %v1954
  %v2055 = vpack.c.b16 %v1957, %v1955
  %v2056 = vpack.c.b16 %v1960, %v1958
  %v2057 = vpack.c.b16 %v1961, %v1959
  %v2058 = vpack.c.b16 %v1964, %v1962
  %v2059 = vpack.c.b16 %v1965, %v1963
  %v2060 = vpack.c.b16 %v1968, %v1966
  %v2061 = vpack.c.b16 %v1969, %v1967
  %v2062 = vpack.c.b16 %v1972, %v1970
  %v2063 = vpack.c.b16 %v1973, %v1971
  %v2064 = vpack.c.b16 %v1976, %v1974
  %v2065 = vpack.c.b16 %v1977, %v1975
  %v2066 = vpack.c.b16 %v1980, %v1978
  %v2067 = vpack.c.b16 %v1981, %v1979
  %v2068 = vpack.c.b16 %v1984, %v1982
  %v2069 = vpack.c.b16 %v1985, %v1983
  %v2070 = vpack.c.b16 %v1988, %v1986
  %v2071 = vpack.c.b16 %v1989, %v1987
  %v2072 = vpack.c.b16 %v1992, %v1990
  %v2073 = vpack.c.b16 %v1993, %v1991
  %v2074 = vpack.c.b16 %v1996, %v1994
  %v2075 = vpack.c.b16 %v1997, %v1995
  %v2076 = vpack.c.b16 %v2000, %v1998
  %v2077 = vpack.c.b16 %v2001, %v1999
  %v2078 = vpack.c.b16 %v2004, %v2002
  %v2079 = vpack.c.b16 %v2005, %v2003
  %v2080 = vpack.c.b16 %v2008, %v2006
  %v2081 = vpack.c.b16 %v2009, %v2007
  %v2082 = vpack.c.b16 %v2012, %v2010
  %v2083 = vpack.c.b16 %v2013, %v2011
  %v2084 = vpack.c.b16 %v2016, %v2014
  %v2085 = vpack.c.b16 %v2017, %v2015
  %v2086 = vpack.c.b16 %v2020, %v2018
  %v2087 = vpack.c.b16 %v2021, %v2019
  %v2088 = vpack.c.b16 %v2024, %v2022
  %v2089 = vpack.c.b16 %v2025, %v2023
  %2154 = vmatprep.subr.bf16.mxu0 %v2041
  %2155 = vmatpush1.bf16.msra.mxu0 %v2040
  %2156 = vmatprep.subr.bf16.mxu0 %v2039
  %2157 = vmatpush1.bf16.msra.mxu0 %v2038
  %2158 = vmatprep.subr.bf16.mxu0 %v2037
  %2159 = vmatpush1.bf16.msra.mxu0 %v2036
  %2160 = vmatprep.subr.bf16.mxu0 %v2035
  %2161 = vmatpush1.bf16.msra.mxu0 %v2034
  %2162 = vmatprep.subr.bf16.mxu0 %v2033
  %2163 = vmatpush1.bf16.msra.mxu0 %v2032
  %2164 = vmatprep.subr.bf16.mxu0 %v2031
  %2165 = vmatpush1.bf16.msra.mxu0 %v2030
  %2166 = vmatprep.subr.bf16.mxu0 %v2029
  %2167 = vmatpush1.bf16.msra.mxu0 %v2028
  %2168 = vmatprep.subr.bf16.mxu0 %v2027
  %2169 = vmatpush1.bf16.msra.mxu0 %v2026
  %2170 = vmatprep.subr.bf16.mxu0 %v2057
  %2171 = vmatpush2.bf16.msra.mxu0 %v2056
  %2172 = vmatprep.subr.bf16.mxu0 %v2055
  %2173 = vmatpush2.bf16.msra.mxu0 %v2054
  %2174 = vmatprep.subr.bf16.mxu0 %v2053
  %2175 = vmatpush2.bf16.msra.mxu0 %v2052
  %2176 = vmatprep.subr.bf16.mxu0 %v2051
  %2177 = vmatpush2.bf16.msra.mxu0 %v2050
  %2178 = vmatprep.subr.bf16.mxu0 %v2049
  %2179 = vmatpush2.bf16.msra.mxu0 %v2048
  %2180 = vmatprep.subr.bf16.mxu0 %v2047
  %2181 = vmatpush2.bf16.msra.mxu0 %v2046
  %2182 = vmatprep.subr.bf16.mxu0 %v2045
  %2183 = vmatpush2.bf16.msra.mxu0 %v2044
  %2184 = vmatprep.subr.bf16.mxu0 %v2043
  %2185 = vmatpush2.bf16.msra.mxu0 %v2042
  %2186 = vmatprep.mubr.bf16.mxu0 %v1755
  %2187 = vmatmul.mubr.bf16.gmra.mxu0 %v1754
  %v2188 = vpop.f32.mrf.mxu0
  %v2189 = vadd.f32 %v1827, %v2188
  %v2190 = vpop.f32.mrf.mxu0
  %v2191 = vadd.f32 %v1831, %v2190
  %v2192 = vpop.f32.mrf.mxu0
  %v2193 = vpop.f32.mrf.mxu0
  %2194 = vdwg.mxu0
  %2195 = vmatprep.subr.bf16.mxu0 %v2073
  %2196 = vmatpush1.bf16.msra.mxu0 %v2072
  %2197 = vmatprep.subr.bf16.mxu0 %v2071
  %2198 = vmatpush1.bf16.msra.mxu0 %v2070
  %2199 = vmatprep.subr.bf16.mxu0 %v2069
  %2200 = vmatpush1.bf16.msra.mxu0 %v2068
  %2201 = vmatprep.subr.bf16.mxu0 %v2067
  %2202 = vmatpush1.bf16.msra.mxu0 %v2066
  %2203 = vmatprep.subr.bf16.mxu0 %v2065
  %2204 = vmatpush1.bf16.msra.mxu0 %v2064
  %2205 = vmatprep.subr.bf16.mxu0 %v2063
  %2206 = vmatpush1.bf16.msra.mxu0 %v2062
  %2207 = vmatprep.subr.bf16.mxu0 %v2061
  %2208 = vmatpush1.bf16.msra.mxu0 %v2060
  %2209 = vmatprep.subr.bf16.mxu0 %v2059
  %2210 = vmatpush1.bf16.msra.mxu0 %v2058
  %2211 = vmatprep.subr.bf16.mxu0 %v2089
  %2212 = vmatpush2.bf16.msra.mxu0 %v2088
  %2213 = vmatprep.subr.bf16.mxu0 %v2087
  %2214 = vmatpush2.bf16.msra.mxu0 %v2086
  %2215 = vmatprep.subr.bf16.mxu0 %v2085
  %2216 = vmatpush2.bf16.msra.mxu0 %v2084
  %2217 = vmatprep.subr.bf16.mxu0 %v2083
  %2218 = vmatpush2.bf16.msra.mxu0 %v2082
  %2219 = vmatprep.subr.bf16.mxu0 %v2081
  %2220 = vmatpush2.bf16.msra.mxu0 %v2080
  %2221 = vmatprep.subr.bf16.mxu0 %v2079
  %2222 = vmatpush2.bf16.msra.mxu0 %v2078
  %2223 = vmatprep.subr.bf16.mxu0 %v2077
  %2224 = vmatpush2.bf16.msra.mxu0 %v2076
  %2225 = vmatprep.subr.bf16.mxu0 %v2075
  %2226 = vmatpush2.bf16.msra.mxu0 %v2074
  %2227 = vmatprep.mubr.bf16.mxu0 %v1757
  %2228 = vmatmul.mubr.bf16.gmra.mxu0 %v1756
  %v2229 = vpop.f32.mrf.mxu0
  %v2230 = vadd.f32 %v2189, %v2229
  %v2231 = vpop.f32.mrf.mxu0
  %v2232 = vadd.f32 %v2191, %v2231
  %v2233 = vpop.f32.mrf.mxu0
  %v2234 = vpop.f32.mrf.mxu0
  %2235 = vdwg.mxu0
  %v2236 = vmax.f32 %v2230, 0.0
  %v2237 = vmax.f32 %v2232, 0.0
  %v2238 = vpack.c.bf16 %v2236, %v2236
  %v2239 = vpack.c.bf16 %v2237, %v2237
  %v2240 = vld [vmem:[%s5] sm:$0xf]
  %v2241 = vld [vmem:[%s5 + $0x4] sm:$0xf]
  %v2242 = vld [vmem:[%s5 + $0x8] sm:$0xf]
  %v2243 = vld [vmem:[%s5 + $0xc] sm:$0xf]
  %v2244 = vld [vmem:[%s5 + $0x10] sm:$0xf]
  %v2245 = vld [vmem:[%s5 + $0x14] sm:$0xf]
  %v2246 = vld [vmem:[%s5 + $0x18] sm:$0xf]
  %v2247 = vld [vmem:[%s5 + $0x1c] sm:$0xf]
  %v2248 = vld [vmem:[%s5 + $0x20] sm:$0xf]
  %v2249 = vld [vmem:[%s5 + $0x24] sm:$0xf]
  %v2250 = vld [vmem:[%s5 + $0x28] sm:$0xf]
  %v2251 = vld [vmem:[%s5 + $0x2c] sm:$0xf]
  %v2252 = vld [vmem:[%s5 + $0x30] sm:$0xf]
  %v2253 = vld [vmem:[%s5 + $0x34] sm:$0xf]
  %v2254 = vld [vmem:[%s5 + $0x38] sm:$0xf]
  %v2255 = vld [vmem:[%s5 + $0x3c] sm:$0xf]
  %v2256 = vld [vmem:[%s5 + $0x40] sm:$0xf]
  %v2257 = vld [vmem:[%s5 + $0x44] sm:$0xf]
  %v2258 = vld [vmem:[%s5 + $0x48] sm:$0xf]
  %v2259 = vld [vmem:[%s5 + $0x4c] sm:$0xf]
  %v2260 = vld [vmem:[%s5 + $0x50] sm:$0xf]
  %v2261 = vld [vmem:[%s5 + $0x54] sm:$0xf]
  %v2262 = vld [vmem:[%s5 + $0x58] sm:$0xf]
  %v2263 = vld [vmem:[%s5 + $0x5c] sm:$0xf]
  %v2264 = vld [vmem:[%s5 + $0x60] sm:$0xf]
  %v2265 = vld [vmem:[%s5 + $0x64] sm:$0xf]
  %v2266 = vld [vmem:[%s5 + $0x68] sm:$0xf]
  %v2267 = vld [vmem:[%s5 + $0x6c] sm:$0xf]
  %v2268 = vld [vmem:[%s5 + $0x70] sm:$0xf]
  %v2269 = vld [vmem:[%s5 + $0x74] sm:$0xf]
  %v2270 = vld [vmem:[%s5 + $0x78] sm:$0xf]
  %v2271 = vld [vmem:[%s5 + $0x7c] sm:$0xf]
  %v2272 = vld [vmem:[%s6] sm:$0x1]
  %v2274 = vlaneseq
  %v2275 = vshrl.u32 %v2274, 7
  %v2276 = vsub.s32 0, %v2275
  %v2277 = vrot.slane %v2272, %v2276
  %v2311 = vunpack.c.l.b16 %v2240
  %v2312 = vunpack.c.l.b16 %v2241
  %v2313 = vunpack.c.l.b16 %v2242
  %v2314 = vunpack.c.l.b16 %v2243
  %v2315 = vunpack.c.l.b16 %v2244
  %v2316 = vunpack.c.l.b16 %v2245
  %v2317 = vunpack.c.l.b16 %v2246
  %v2318 = vunpack.c.l.b16 %v2247
  %v2319 = vunpack.c.l.b16 %v2248
  %v2320 = vunpack.c.l.b16 %v2249
  %v2321 = vunpack.c.l.b16 %v2250
  %v2322 = vunpack.c.l.b16 %v2251
  %v2323 = vunpack.c.l.b16 %v2252
  %v2324 = vunpack.c.l.b16 %v2253
  %v2325 = vunpack.c.l.b16 %v2254
  %v2326 = vunpack.c.l.b16 %v2255
  %v2327 = vunpack.c.l.b16 %v2256
  %v2328 = vunpack.c.l.b16 %v2257
  %v2329 = vunpack.c.l.b16 %v2258
  %v2330 = vunpack.c.l.b16 %v2259
  %v2331 = vunpack.c.l.b16 %v2260
  %v2332 = vunpack.c.l.b16 %v2261
  %v2333 = vunpack.c.l.b16 %v2262
  %v2334 = vunpack.c.l.b16 %v2263
  %v2335 = vunpack.c.l.b16 %v2264
  %v2336 = vunpack.c.l.b16 %v2265
  %v2337 = vunpack.c.l.b16 %v2266
  %v2338 = vunpack.c.l.b16 %v2267
  %v2339 = vunpack.c.l.b16 %v2268
  %v2340 = vunpack.c.l.b16 %v2269
  %v2341 = vunpack.c.l.b16 %v2270
  %v2342 = vunpack.c.l.b16 %v2271
  %v2343 = vpack.c.b16 %v2312, %v2311
  %v2344 = vpack.c.b16 %v2314, %v2313
  %v2345 = vpack.c.b16 %v2316, %v2315
  %v2346 = vpack.c.b16 %v2318, %v2317
  %v2347 = vpack.c.b16 %v2320, %v2319
  %v2348 = vpack.c.b16 %v2322, %v2321
  %v2349 = vpack.c.b16 %v2324, %v2323
  %v2350 = vpack.c.b16 %v2326, %v2325
  %v2351 = vpack.c.b16 %v2328, %v2327
  %v2352 = vpack.c.b16 %v2330, %v2329
  %v2353 = vpack.c.b16 %v2332, %v2331
  %v2354 = vpack.c.b16 %v2334, %v2333
  %v2355 = vpack.c.b16 %v2336, %v2335
  %v2356 = vpack.c.b16 %v2338, %v2337
  %v2357 = vpack.c.b16 %v2340, %v2339
  %v2358 = vpack.c.b16 %v2342, %v2341
  %2375 = vmatprep.subr.bf16.mxu0 0
  %2376 = vmatpush1.bf16.msra.mxu0 %v2350
  %2377 = vmatprep.subr.bf16.mxu0 0
  %2378 = vmatpush1.bf16.msra.mxu0 %v2349
  %2379 = vmatprep.subr.bf16.mxu0 0
  %2380 = vmatpush1.bf16.msra.mxu0 %v2348
  %2381 = vmatprep.subr.bf16.mxu0 0
  %2382 = vmatpush1.bf16.msra.mxu0 %v2347
  %2383 = vmatprep.subr.bf16.mxu0 0
  %2384 = vmatpush1.bf16.msra.mxu0 %v2346
  %2385 = vmatprep.subr.bf16.mxu0 0
  %2386 = vmatpush1.bf16.msra.mxu0 %v2345
  %2387 = vmatprep.subr.bf16.mxu0 0
  %2388 = vmatpush1.bf16.msra.mxu0 %v2344
  %2389 = vmatprep.subr.bf16.mxu0 0
  %2390 = vmatpush1.bf16.msra.mxu0 %v2343
  %2391 = vmatprep.subr.bf16.mxu0 0
  %2392 = vmatpush2.bf16.msra.mxu0 %v2358
  %2393 = vmatprep.subr.bf16.mxu0 0
  %2394 = vmatpush2.bf16.msra.mxu0 %v2357
  %2395 = vmatprep.subr.bf16.mxu0 0
  %2396 = vmatpush2.bf16.msra.mxu0 %v2356
  %2397 = vmatprep.subr.bf16.mxu0 0
  %2398 = vmatpush2.bf16.msra.mxu0 %v2355
  %2399 = vmatprep.subr.bf16.mxu0 0
  %2400 = vmatpush2.bf16.msra.mxu0 %v2354
  %2401 = vmatprep.subr.bf16.mxu0 0
  %2402 = vmatpush2.bf16.msra.mxu0 %v2353
  %2403 = vmatprep.subr.bf16.mxu0 0
  %2404 = vmatpush2.bf16.msra.mxu0 %v2352
  %2405 = vmatprep.subr.bf16.mxu0 0
  %2406 = vmatpush2.bf16.msra.mxu0 %v2351
  %2407 = vmatprep.mubr.bf16.mxu0 %v2239
  %2408 = vmatmul.mubr.bf16.gmra.mxu0 %v2238
  %v2409 = vpop.f32.mrf.mxu0
  %v2410 = vadd.f32 %v2277, %v2409
  %v2411 = vpop.f32.mrf.mxu0
  %v2412 = vpop.f32.mrf.mxu0
  %v2413 = vpop.f32.mrf.mxu0
  %2414 = vdwg.mxu0
  %v2415 = vmax.f32 %v2410, 0.0
  %2416 = vst [vmem:[%s7] sm:$0xff] %v2415
  // Predicated region
  $region30: #{simple_fc_forward.1} parent=0 // pred_check
    _
  $region31: #{simple_fc_forward.1} parent=0 // pred_check_branch
    %2418 = sbr.rel (0) target = $region33
  $region32: #{simple_fc_forward.1} parent=0 // pred_region
    _
  $region33: #{simple_fc_forward.1} parent=0 // pred_fallthru
    _
  // Predicated region
  $region34: #{simple_fc_forward.1} parent=0 // pred_check
    _
  $region35: #{simple_fc_forward.1} parent=0 // pred_check_branch
    %2420 = sbr.rel (0) target = $region37
  $region36: #{simple_fc_forward.1} parent=0 // pred_region
    _
  $region37: #{simple_fc_forward.1} parent=0 // pred_fallthru
    _

</llo_original>
